<compile_context>
chip_gen: v6e
topology: v6e:2x2x1
jax: 0.10.0
libtpu: 0.0.40
codegen_flags: <defaults>
</compile_context>

<pallas_src>
import functools
import math

import jax
import jax.numpy as jnp
from jax.experimental import pallas as pl
from jax.experimental.pallas import tpu as pltpu

EPS = 1e-5  # nn.BatchNorm2d default eps


# ---------------------------------------------------------------------------
# kernels
# ---------------------------------------------------------------------------
def _conv_rows(x_f32, w_ref, rows_per_image):
    """3x3 conv (padding=1) on lane-dense rows via 3 banded bf16 matmuls.

    x_f32:  (B*H, G*W*C) activation rows, f32.
    w_ref:  (3, G*W*C, G*W*C) banded block-Toeplitz weights (bf16); horizontal
            zero padding is folded into the band, the block-diagonal structure
            keeps lane-packed images independent.
    Vertical zero padding: roll the dy=0 / dy=2 partial outputs by +/-1 row
    (pltpu.roll -> XLU) and mask the first / last row of every image.
    Returns f32 (B*H, G*W*C).
    """
    bh, gwc = x_f32.shape
    xb = x_f32.astype(jnp.bfloat16)
    mid = jnp.dot(xb, w_ref[1], preferred_element_type=jnp.float32)
    up = jnp.dot(xb, w_ref[0], preferred_element_type=jnp.float32)
    dn = jnp.dot(xb, w_ref[2], preferred_element_type=jnp.float32)
    row = jax.lax.broadcasted_iota(jnp.int32, (bh, gwc), 0) % rows_per_image
    y = mid
    # out[r] += up[r-1]   (kernel row dy=0), zero at the top row of each image
    y = y + jnp.where(row == 0, 0.0, pltpu.roll(up, 1, axis=0))
    # out[r] += dn[r+1]   (kernel row dy=2), zero at the bottom row of each image
    y = y + jnp.where(row == rows_per_image - 1, 0.0,
                      pltpu.roll(dn, bh - 1, axis=0))
    return y


def _emit_stats(y, stat_ref):
    """Per-column partial (sum, sum^2) for BatchNorm, written with one store."""
    stat_ref[...] = jnp.concatenate(
        [jnp.sum(y, axis=0, keepdims=True),
         jnp.sum(y * y, axis=0, keepdims=True)], axis=0)


def conv1_kernel(x_ref, w_ref, y1_ref, stat_ref, *, rows_per_image):
    y = _conv_rows(x_ref[...], w_ref, rows_per_image)
    _emit_stats(y, stat_ref)                       # stats from f32 accumulator
    y1_ref[...] = y.astype(y1_ref.dtype)           # bf16 intermediate to HBM


def bn_relu_conv2_kernel(y1_ref, s_ref, t_ref, w_ref, y2_ref, stat_ref, *,
                         rows_per_image):
    # BN1 (folded global-stat scale/shift) + ReLU in f32.
    hidden = jnp.maximum(
        y1_ref[...].astype(jnp.float32) * s_ref[...] + t_ref[...], 0.0)
    y = _conv_rows(hidden, w_ref, rows_per_image)
    _emit_stats(y, stat_ref)
    y2_ref[...] = y.astype(y2_ref.dtype)


def bn_add_relu_kernel(y2_ref, s_ref, t_ref, x_ref, out_ref):
    out_ref[...] = jnp.maximum(
        y2_ref[...].astype(jnp.float32) * s_ref[...] + t_ref[...] + x_ref[...],
        0.0)


# ---------------------------------------------------------------------------
# wrapper helpers
# ---------------------------------------------------------------------------
def _band_weights(w_hwio, width, group):
    """(3,3,Cin,Cout) kernel -> 3 block-diagonal banded (G*W*Cin, G*W*Cout)
    matrices (one per kernel row dy). Horizontal zero padding is implicit in
    the band; block-diag over G keeps lane-packed images independent."""
    kh, kw, cin, cout = w_hwio.shape
    eye_g = jnp.eye(group, dtype=jnp.float32)
    mats = []
    for dy in range(kh):
        m = jnp.zeros((width * cin, width * cout), jnp.float32)
        for dx in range(kw):
            m = m + jnp.kron(jnp.eye(width, k=1 - dx, dtype=jnp.float32),
                             w_hwio[dy, dx])
        mats.append(jnp.kron(eye_g, m))
    return jnp.stack(mats).astype(jnp.bfloat16)


def _finalize_stats(partials, count, group, width, channels):
    s = partials.reshape(-1, 2, group, width, channels).sum(axis=(0, 2, 3))
    mean = s[0] / count
    var = jnp.maximum(s[1] / count - mean * mean, 0.0)  # biased var (PyTorch norm path)
    return mean, var


def _fold_bn(mean, var, gamma, beta, group, width):
    scale = gamma * jax.lax.rsqrt(var + EPS)
    shift = beta - mean * scale
    rep = group * width  # lane column = g*W*C + w*C + c
    return (jnp.tile(scale, rep).reshape(1, -1),
            jnp.tile(shift, rep).reshape(1, -1))


def _choose_group(n, wc):
    """Smallest divisor g of n with g*W*C >= 128 (lane-dense stores)."""
    for g in range(1, n + 1):
        if n % g == 0 and g * wc >= 128:
            return g
    return n


def _choose_row_groups(ng, h, target_rows=256):
    """Largest divisor b of ng with b*h <= target_rows (bigger MXU M blocks)."""
    best = 1
    for b in range(1, ng + 1):
        if ng % b == 0 and b * h <= target_rows:
            best = b
    return best


# ---------------------------------------------------------------------------
# forward
# ---------------------------------------------------------------------------
@jax.jit
def residual_block(x_nchw, params):
    """Forward of ResidualBlock (stride=1, downsample=None => Cin == Cout).

    Conv biases in `params` are accepted but unused: a per-channel constant
    added before BatchNorm cancels exactly in the forward output.
    """
    w1, _b1, g1, be1, w2, _b2, g2, be2 = params
    n, c, h, w = x_nchw.shape
    assert w1.shape[2] == w1.shape[3] == c, "identity shortcut requires Cin == Cout"
    assert h % 8 == 0, "row layout assumes H is a multiple of 8"

    wc = w * c
    g = _choose_group(n, wc)          # images packed along lanes
    ng = n // g                       # row groups
    gwc = g * wc                      # lane width (>=128 when possible)
    b = _choose_row_groups(ng, h)     # row groups per grid step
    grid = ng // b
    bh = b * h                        # rows per grid step

    band_bytes = 2 * 3 * gwc * gwc
    assert band_bytes <= 24 * 1024 * 1024, (
        "banded conv weights too large for resident VMEM; "
        "use per-tap K=Cin dots / W sub-band tiling for this size")

    # (N,C,H,W) -> (NG, H, G, W, C) -> (NG*H, G*W*C): rows = (group, h),
    # lanes = (image-in-group, w, c).
    x_packed = jnp.transpose(
        x_nchw.reshape(ng, g, c, h, w).astype(jnp.float32),
        (0, 3, 1, 4, 2)).reshape(ng * h, gwc)

    band1 = _band_weights(w1, w, g)   # (3, gwc, gwc) bf16, resident in VMEM
    band2 = _band_weights(w2, w, g)

    blk_bytes = (bh * gwc * 4            # f32 activation block (in or out)
                 + 2 * bh * gwc * 2      # bf16 y1/y2 blocks
                 + band_bytes            # band weights
                 + 4 * gwc * 4)          # stats + BN vectors
    vmem_limit = int(min(max(4 * blk_bytes, 32 * 1024 * 1024),
                         64 * 1024 * 1024))
    cparams = pltpu.CompilerParams(dimension_semantics=("parallel",),
                                   vmem_limit_bytes=vmem_limit)

    row_blk = pl.BlockSpec((bh, gwc), lambda i: (i, 0))
    stat_blk = pl.BlockSpec((None, 2, gwc), lambda i: (i, 0, 0))
    vec_blk = pl.BlockSpec((1, gwc), lambda i: (0, 0))
    wgt_blk = pl.BlockSpec((3, gwc, gwc), lambda i: (0, 0, 0))

    # ---- pass 1: conv1 (banded bf16 matmuls) + BN1 partial stats ------------
    y1, st1 = pl.pallas_call(
        functools.partial(conv1_kernel, rows_per_image=h),
        grid=(grid,),
        in_specs=[row_blk, wgt_blk],
        out_specs=(row_blk, stat_blk),
        out_shape=(jax.ShapeDtypeStruct((ng * h, gwc), jnp.bfloat16),
                   jax.ShapeDtypeStruct((grid, 2, gwc), jnp.float32)),
        compiler_params=cparams,
    )(x_packed, band1)

    mean1, var1 = _finalize_stats(st1, n * h * w, g, w, c)
    s1, t1 = _fold_bn(mean1, var1, g1, be1, g, w)

    # ---- pass 2: BN1 + ReLU + conv2 + BN2 partial stats ----------------------
    y2, st2 = pl.pallas_call(
        functools.partial(bn_relu_conv2_kernel, rows_per_image=h),
        grid=(grid,),
        in_specs=[row_blk, vec_blk, vec_blk, wgt_blk],
        out_specs=(row_blk, stat_blk),
        out_shape=(jax.ShapeDtypeStruct((ng * h, gwc), jnp.bfloat16),
                   jax.ShapeDtypeStruct((grid, 2, gwc), jnp.float32)),
        compiler_params=cparams,
    )(y1, s1, t1, band2)

    mean2, var2 = _finalize_stats(st2, n * h * w, g, w, c)
    s2, t2 = _fold_bn(mean2, var2, g2, be2, g, w)

    # ---- pass 3: BN2 + residual add + ReLU ----------------------------------
    out2d = pl.pallas_call(
        bn_add_relu_kernel,
        grid=(grid,),
        in_specs=[row_blk, vec_blk, vec_blk, row_blk],
        out_specs=row_blk,
        out_shape=jax.ShapeDtypeStruct((ng * h, gwc), jnp.float32),
        compiler_params=cparams,
    )(y2, s2, t2, x_packed)

    return jnp.transpose(out2d.reshape(ng, h, g, w, c),
                         (0, 2, 4, 1, 3)).reshape(n, c, h, w)


# ---------------------------------------------------------------------------
# params / references
# ---------------------------------------------------------------------------
def init_params(keys, cin, cout):
    """Deterministic init mirroring nn.Conv2d / nn.BatchNorm2d param shapes."""
    bound1 = 1.0 / math.sqrt(cin * 9)
    bound2 = 1.0 / math.sqrt(cout * 9)
    w1 = jax.random.uniform(keys[0], (3, 3, cin, cout), jnp.float32, -bound1, bound1)
    b1 = jax.random.uniform(keys[1], (cout,), jnp.float32, -bound1, bound1)
    g1 = 1.0 + 0.1 * jax.random.normal(keys[2], (cout,), jnp.float32)
    be1 = 0.1 * jax.random.normal(keys[3], (cout,), jnp.float32)
    w2 = jax.random.uniform(keys[4], (3, 3, cout, cout), jnp.float32, -bound2, bound2)
    b2 = jax.random.uniform(keys[5], (cout,), jnp.float32, -bound2, bound2)
    g2 = 1.0 + 0.1 * jax.random.normal(keys[6], (cout,), jnp.float32)
    be2 = 0.1 * jax.random.normal(keys[7], (cout,), jnp.float32)
    return (w1, b1, g1, be1, w2, b2, g2, be2)


def _ref_conv(x, w, dtype):
    return jax.lax.conv_general_dilated(
        x.astype(dtype), w.astype(dtype), (1, 1), "SAME",
        dimension_numbers=("NHWC", "HWIO", "NHWC"),
        preferred_element_type=jnp.float32)


def ref_forward_f32(x_nchw, params):
    """Faithful f32 reference of the PyTorch module (training-mode BN, conv bias kept)."""
    w1, b1, g1, be1, w2, b2, g2, be2 = params
    x = jnp.transpose(x_nchw, (0, 2, 3, 1)).astype(jnp.float32)

    def conv_bn(inp, w, b, gm, be, relu):
        y = _ref_conv(inp, w, jnp.float32) + b
        m = jnp.mean(y, axis=(0, 1, 2), keepdims=True)
        v = jnp.mean((y - m) ** 2, axis=(0, 1, 2), keepdims=True)
        y = (y - m) * gm / jnp.sqrt(v + EPS) + be
        return jnp.maximum(y, 0.0) if relu else y

    y = conv_bn(x, w1, b1, g1, be1, True)
    y = conv_bn(y, w2, b2, g2, be2, False)
    y = jnp.maximum(y + x, 0.0)
    return jnp.transpose(y, (0, 3, 1, 2))


def ref_forward_kernel_math(x_nchw, params):
    """Mirror of kernel numerics: bf16 conv operands (f32 accum), BN stats from
    the f32 conv output, bf16 rounding of the stored intermediate, f32 BN/ReLU,
    no conv bias (cancels exactly under BatchNorm)."""
    w1, _b1, g1, be1, w2, _b2, g2, be2 = params
    x = jnp.transpose(x_nchw, (0, 2, 3, 1)).astype(jnp.float32)

    def conv_bn(inp, w, gm, be, relu):
        y = _ref_conv(inp, w, jnp.bfloat16)
        m = jnp.mean(y, axis=(0, 1, 2))
        v = jnp.mean(y * y, axis=(0, 1, 2)) - m * m
        scale = gm * jax.lax.rsqrt(v + EPS)
        shift = be - m * scale
        y = y.astype(jnp.bfloat16).astype(jnp.float32)  # bf16 HBM intermediate
        y = y * scale + shift
        return jnp.maximum(y, 0.0) if relu else y

    y = conv_bn(x, w1, g1, be1, True)
    y = conv_bn(y, w2, g2, be2, False)
    y = jnp.maximum(y + x, 0.0)
    return jnp.transpose(y, (0, 3, 1, 2))


if __name__ == "__main__":
    N, C, H, W = 2, 4, 16, 16
    key = jax.random.PRNGKey(0)
    kx, *kp = jax.random.split(key, 9)
    x = jax.random.normal(kx, (N, C, H, W), jnp.float32)
    params = init_params(kp, C, C)

    out = jax.block_until_ready(residual_block(x, params))
    assert out.shape == (N, C, H, W)

    # tight check: same math as the kernel (bf16 operands + bf16 intermediates)
    ref_tight = ref_forward_kernel_math(x, params)
    assert bool(jnp.allclose(out, ref_tight, atol=1e-2, rtol=1e-2)), (
        "mismatch vs bf16-mirror reference: max abs err = %e"
        % float(jnp.max(jnp.abs(out - ref_tight))))

    # loose check: faithful f32 PyTorch semantics (difference = bf16 rounding)
    ref_f32 = ref_forward_f32(x, params)
    assert bool(jnp.allclose(out, ref_f32, atol=7.5e-2, rtol=7.5e-2)), (
        "mismatch vs f32 reference: max abs err = %e"
        % float(jnp.max(jnp.abs(out - ref_f32))))

    print("KERNEL_OK")
</pallas_src>

<mosaic_0001>
module attributes {stable_mosaic.version = 11 : i64} {
  func.func @conv1_kernel(%arg0: i32, %arg1: memref<16x128xf32, #tpu.memory_space<vmem>>, %arg2: memref<3x128x128xbf16, #tpu.memory_space<vmem>>, %arg3: memref<16x128xbf16, #tpu.memory_space<vmem>>, %arg4: memref<1x2x128xf32, #tpu.memory_space<vmem>>) attributes {dimension_semantics = [#tpu.dimension_semantics<parallel>], iteration_bounds = array<i64: 1>, scalar_prefetch = 0 : i64, scratch_operands = 0 : i64, tpu.core_type = #tpu.core_type<tc>, window_params = [{transform_indices = @transform_0, window_bounds = array<i64: 16, 128>}, {pipeline_mode = #tpu.pipeline_mode<synchronous>, transform_indices = @transform_1, window_bounds = array<i64: 3, 128, 128>}, {transform_indices = @transform_2, window_bounds = array<i64: 16, 128>}, {transform_indices = @transform_3, window_bounds = array<i64: 1, 2, 128>}]} {
    %c0 = arith.constant 0 : index
    %c0_0 = arith.constant 0 : index
    %0 = vector.load %arg1[%c0, %c0_0] : memref<16x128xf32, #tpu.memory_space<vmem>>, vector<16x128xf32>
    %1 = arith.truncf %0 : vector<16x128xf32> to vector<16x128xbf16>
    %c1 = arith.constant 1 : index
    %c0_1 = arith.constant 0 : index
    %c0_2 = arith.constant 0 : index
    %2 = vector.load %arg2[%c1, %c0_1, %c0_2] : memref<3x128x128xbf16, #tpu.memory_space<vmem>>, vector<1x128x128xbf16>
    %3 = vector.shape_cast %2 : vector<1x128x128xbf16> to vector<128x128xbf16>
    %cst = arith.constant dense<0.000000e+00> : vector<16x128xf32>
    %4 = tpu.matmul %1, %3, %cst {dimension_numbers = #tpu.dot_dimension_numbers<[1], [0], [0], [1], [0, 0, 1, 1], [], []>} : vector<16x128xbf16>, vector<128x128xbf16>, vector<16x128xf32> -> vector<16x128xf32>
    %c0_3 = arith.constant 0 : index
    %c0_4 = arith.constant 0 : index
    %c0_5 = arith.constant 0 : index
    %5 = vector.load %arg2[%c0_3, %c0_4, %c0_5] : memref<3x128x128xbf16, #tpu.memory_space<vmem>>, vector<1x128x128xbf16>
    %6 = vector.shape_cast %5 : vector<1x128x128xbf16> to vector<128x128xbf16>
    %cst_6 = arith.constant dense<0.000000e+00> : vector<16x128xf32>
    %7 = tpu.matmul %1, %6, %cst_6 {dimension_numbers = #tpu.dot_dimension_numbers<[1], [0], [0], [1], [0, 0, 1, 1], [], []>} : vector<16x128xbf16>, vector<128x128xbf16>, vector<16x128xf32> -> vector<16x128xf32>
    %c2 = arith.constant 2 : index
    %c0_7 = arith.constant 0 : index
    %c0_8 = arith.constant 0 : index
    %8 = vector.load %arg2[%c2, %c0_7, %c0_8] : memref<3x128x128xbf16, #tpu.memory_space<vmem>>, vector<1x128x128xbf16>
    %9 = vector.shape_cast %8 : vector<1x128x128xbf16> to vector<128x128xbf16>
    %cst_9 = arith.constant dense<0.000000e+00> : vector<16x128xf32>
    %10 = tpu.matmul %1, %9, %cst_9 {dimension_numbers = #tpu.dot_dimension_numbers<[1], [0], [0], [1], [0, 0, 1, 1], [], []>} : vector<16x128xbf16>, vector<128x128xbf16>, vector<16x128xf32> -> vector<16x128xf32>
    %11 = tpu.iota {dimensions = array<i32: 0>} : vector<16x128xi32>
    %c16_i32 = arith.constant 16 : i32
    %c0_i32 = arith.constant 0 : i32
    %12 = arith.cmpi eq, %c16_i32, %c0_i32 : i32
    %c1_i32 = arith.constant 1 : i32
    %13 = arith.select %12, %c1_i32, %c16_i32 : i32
    %14 = vector.broadcast %13 : i32 to vector<16x128xi32>
    %15 = arith.remsi %11, %14 : vector<16x128xi32>
    %c0_i32_10 = arith.constant 0 : i32
    %16 = vector.broadcast %c0_i32_10 : i32 to vector<16x128xi32>
    %17 = arith.cmpi ne, %15, %16 : vector<16x128xi32>
    %c0_i32_11 = arith.constant 0 : i32
    %18 = vector.broadcast %c0_i32_11 : i32 to vector<16x128xi32>
    %19 = arith.cmpi slt, %15, %18 : vector<16x128xi32>
    %c0_i32_12 = arith.constant 0 : i32
    %20 = arith.cmpi slt, %13, %c0_i32_12 : i32
    %21 = vector.broadcast %20 : i1 to vector<16x128xi1>
    %22 = vector.broadcast %21 : vector<16x128xi1> to vector<16x128xi1>
    %23 = arith.xori %19, %22 : vector<16x128xi1>
    %24 = arith.andi %23, %17 : vector<16x128xi1>
    %25 = vector.broadcast %13 : i32 to vector<16x128xi32>
    %26 = arith.addi %15, %25 : vector<16x128xi32>
    %27 = arith.select %24, %26, %15 : vector<16x128xi1>, vector<16x128xi32>
    %c0_i32_13 = arith.constant 0 : i32
    %28 = vector.broadcast %c0_i32_13 : i32 to vector<16x128xi32>
    %29 = arith.cmpi eq, %27, %28 : vector<16x128xi32>
    %c1_i32_14 = arith.constant 1 : i32
    %30 = tpu.dynamic_rotate %7 by %c1_i32_14 dim 0 : vector<16x128xf32>, i32 -> vector<16x128xf32>
    %cst_15 = arith.constant 0.000000e+00 : f32
    %31 = vector.broadcast %cst_15 : f32 to vector<16x128xf32>
    %32 = arith.select %29, %31, %30 : vector<16x128xi1>, vector<16x128xf32>
    %33 = arith.addf %4, %32 : vector<16x128xf32>
    %c15_i32 = arith.constant 15 : i32
    %34 = vector.broadcast %c15_i32 : i32 to vector<16x128xi32>
    %35 = arith.cmpi eq, %27, %34 : vector<16x128xi32>
    %c15_i32_16 = arith.constant 15 : i32
    %36 = tpu.dynamic_rotate %10 by %c15_i32_16 dim 0 : vector<16x128xf32>, i32 -> vector<16x128xf32>
    %cst_17 = arith.constant 0.000000e+00 : f32
    %37 = vector.broadcast %cst_17 : f32 to vector<16x128xf32>
    %38 = arith.select %35, %37, %36 : vector<16x128xi1>, vector<16x128xf32>
    %39 = arith.addf %33, %38 : vector<16x128xf32>
    %cst_18 = arith.constant dense<0.000000e+00> : vector<128xf32>
    %40 = vector.multi_reduction <add>, %39, %cst_18 [0] : vector<16x128xf32> to vector<128xf32>
    %41 = vector.shape_cast %40 : vector<128xf32> to vector<1x128xf32>
    %42 = arith.mulf %39, %39 : vector<16x128xf32>
    %cst_19 = arith.constant dense<0.000000e+00> : vector<128xf32>
    %43 = vector.multi_reduction <add>, %42, %cst_19 [0] : vector<16x128xf32> to vector<128xf32>
    %44 = vector.shape_cast %43 : vector<128xf32> to vector<1x128xf32>
    %45 = tpu.concatenate %41, %44 in 0 : vector<1x128xf32>, vector<1x128xf32> -> vector<2x128xf32>
    %c0_20 = arith.constant 0 : index
    %c0_21 = arith.constant 0 : index
    %c0_22 = arith.constant 0 : index
    %46 = vector.load %arg4[%c0_20, %c0_21, %c0_22] : memref<1x2x128xf32, #tpu.memory_space<vmem>>, vector<1x2x128xf32>
    %47 = vector.shape_cast %46 : vector<1x2x128xf32> to vector<2x128xf32>
    %48 = vector.shape_cast %45 : vector<2x128xf32> to vector<1x2x128xf32>
    tpu.vector_store %arg4[%c0_20, %c0_21, %c0_22], %48 {strides = array<i32>} : memref<1x2x128xf32, #tpu.memory_space<vmem>>, vector<1x2x128xf32>,
    %49 = arith.truncf %39 : vector<16x128xf32> to vector<16x128xbf16>
    %c0_23 = arith.constant 0 : index
    %c0_24 = arith.constant 0 : index
    %50 = vector.load %arg3[%c0_23, %c0_24] : memref<16x128xbf16, #tpu.memory_space<vmem>>, vector<16x128xbf16>
    tpu.vector_store %arg3[%c0_23, %c0_24], %49 {strides = array<i32>} : memref<16x128xbf16, #tpu.memory_space<vmem>>, vector<16x128xbf16>,
    return
  }
  func.func @transform_0(%arg0: i32) -> (i32, i32) {
    %c0_i32 = arith.constant 0 : i32
    %c0_i32_0 = arith.constant 0 : i32
    return %arg0, %c0_i32 : i32, i32
  }
  func.func @transform_1(%arg0: i32) -> (i32, i32, i32) {
    %c0_i32 = arith.constant 0 : i32
    %c0_i32_0 = arith.constant 0 : i32
    %c0_i32_1 = arith.constant 0 : i32
    %c0_i32_2 = arith.constant 0 : i32
    return %c0_i32, %c0_i32_0, %c0_i32_1 : i32, i32, i32
  }
  func.func @transform_2(%arg0: i32) -> (i32, i32) {
    %c0_i32 = arith.constant 0 : i32
    %c0_i32_0 = arith.constant 0 : i32
    return %arg0, %c0_i32 : i32, i32
  }
  func.func @transform_3(%arg0: i32) -> (i32, i32, i32) {
    %c0_i32 = arith.constant 0 : i32
    %c0_i32_0 = arith.constant 0 : i32
    %c0_i32_1 = arith.constant 0 : i32
    return %arg0, %c0_i32, %c0_i32_0 : i32, i32, i32
  }
}

module attributes {stable_mosaic.version = 11 : i64} {
  func.func @bn_relu_conv2_kernel(%arg0: i32, %arg1: memref<16x128xbf16, #tpu.memory_space<vmem>>, %arg2: memref<1x128xf32, #tpu.memory_space<vmem>>, %arg3: memref<1x128xf32, #tpu.memory_space<vmem>>, %arg4: memref<3x128x128xbf16, #tpu.memory_space<vmem>>, %arg5: memref<16x128xbf16, #tpu.memory_space<vmem>>, %arg6: memref<1x2x128xf32, #tpu.memory_space<vmem>>) attributes {dimension_semantics = [#tpu.dimension_semantics<parallel>], iteration_bounds = array<i64: 1>, scalar_prefetch = 0 : i64, scratch_operands = 0 : i64, tpu.core_type = #tpu.core_type<tc>, window_params = [{transform_indices = @transform_0, window_bounds = array<i64: 16, 128>}, {pipeline_mode = #tpu.pipeline_mode<synchronous>, transform_indices = @transform_1, window_bounds = array<i64: 1, 128>}, {pipeline_mode = #tpu.pipeline_mode<synchronous>, transform_indices = @transform_2, window_bounds = array<i64: 1, 128>}, {pipeline_mode = #tpu.pipeline_mode<synchronous>, transform_indices = @transform_3, window_bounds = array<i64: 3, 128, 128>}, {transform_indices = @transform_4, window_bounds = array<i64: 16, 128>}, {transform_indices = @transform_5, window_bounds = array<i64: 1, 2, 128>}]} {
    %c0 = arith.constant 0 : index
    %c0_0 = arith.constant 0 : index
    %0 = vector.load %arg1[%c0, %c0_0] : memref<16x128xbf16, #tpu.memory_space<vmem>>, vector<16x128xbf16>
    %1 = arith.extf %0 : vector<16x128xbf16> to vector<16x128xf32>
    %c0_1 = arith.constant 0 : index
    %c0_2 = arith.constant 0 : index
    %2 = vector.load %arg2[%c0_1, %c0_2] : memref<1x128xf32, #tpu.memory_space<vmem>>, vector<1x128xf32>
    %3 = vector.broadcast %2 : vector<1x128xf32> to vector<16x128xf32>
    %4 = arith.mulf %1, %3 : vector<16x128xf32>
    %c0_3 = arith.constant 0 : index
    %c0_4 = arith.constant 0 : index
    %5 = vector.load %arg3[%c0_3, %c0_4] : memref<1x128xf32, #tpu.memory_space<vmem>>, vector<1x128xf32>
    %6 = vector.broadcast %5 : vector<1x128xf32> to vector<16x128xf32>
    %7 = arith.addf %4, %6 : vector<16x128xf32>
    %cst = arith.constant 0.000000e+00 : f32
    %8 = vector.broadcast %cst : f32 to vector<16x128xf32>
    %9 = arith.maximumf %7, %8 : vector<16x128xf32>
    %10 = arith.truncf %9 : vector<16x128xf32> to vector<16x128xbf16>
    %c1 = arith.constant 1 : index
    %c0_5 = arith.constant 0 : index
    %c0_6 = arith.constant 0 : index
    %11 = vector.load %arg4[%c1, %c0_5, %c0_6] : memref<3x128x128xbf16, #tpu.memory_space<vmem>>, vector<1x128x128xbf16>
    %12 = vector.shape_cast %11 : vector<1x128x128xbf16> to vector<128x128xbf16>
    %cst_7 = arith.constant dense<0.000000e+00> : vector<16x128xf32>
    %13 = tpu.matmul %10, %12, %cst_7 {dimension_numbers = #tpu.dot_dimension_numbers<[1], [0], [0], [1], [0, 0, 1, 1], [], []>} : vector<16x128xbf16>, vector<128x128xbf16>, vector<16x128xf32> -> vector<16x128xf32>
    %c0_8 = arith.constant 0 : index
    %c0_9 = arith.constant 0 : index
    %c0_10 = arith.constant 0 : index
    %14 = vector.load %arg4[%c0_8, %c0_9, %c0_10] : memref<3x128x128xbf16, #tpu.memory_space<vmem>>, vector<1x128x128xbf16>
    %15 = vector.shape_cast %14 : vector<1x128x128xbf16> to vector<128x128xbf16>
    %cst_11 = arith.constant dense<0.000000e+00> : vector<16x128xf32>
    %16 = tpu.matmul %10, %15, %cst_11 {dimension_numbers = #tpu.dot_dimension_numbers<[1], [0], [0], [1], [0, 0, 1, 1], [], []>} : vector<16x128xbf16>, vector<128x128xbf16>, vector<16x128xf32> -> vector<16x128xf32>
    %c2 = arith.constant 2 : index
    %c0_12 = arith.constant 0 : index
    %c0_13 = arith.constant 0 : index
    %17 = vector.load %arg4[%c2, %c0_12, %c0_13] : memref<3x128x128xbf16, #tpu.memory_space<vmem>>, vector<1x128x128xbf16>
    %18 = vector.shape_cast %17 : vector<1x128x128xbf16> to vector<128x128xbf16>
    %cst_14 = arith.constant dense<0.000000e+00> : vector<16x128xf32>
    %19 = tpu.matmul %10, %18, %cst_14 {dimension_numbers = #tpu.dot_dimension_numbers<[1], [0], [0], [1], [0, 0, 1, 1], [], []>} : vector<16x128xbf16>, vector<128x128xbf16>, vector<16x128xf32> -> vector<16x128xf32>
    %20 = tpu.iota {dimensions = array<i32: 0>} : vector<16x128xi32>
    %c16_i32 = arith.constant 16 : i32
    %c0_i32 = arith.constant 0 : i32
    %21 = arith.cmpi eq, %c16_i32, %c0_i32 : i32
    %c1_i32 = arith.constant 1 : i32
    %22 = arith.select %21, %c1_i32, %c16_i32 : i32
    %23 = vector.broadcast %22 : i32 to vector<16x128xi32>
    %24 = arith.remsi %20, %23 : vector<16x128xi32>
    %c0_i32_15 = arith.constant 0 : i32
    %25 = vector.broadcast %c0_i32_15 : i32 to vector<16x128xi32>
    %26 = arith.cmpi ne, %24, %25 : vector<16x128xi32>
    %c0_i32_16 = arith.constant 0 : i32
    %27 = vector.broadcast %c0_i32_16 : i32 to vector<16x128xi32>
    %28 = arith.cmpi slt, %24, %27 : vector<16x128xi32>
    %c0_i32_17 = arith.constant 0 : i32
    %29 = arith.cmpi slt, %22, %c0_i32_17 : i32
    %30 = vector.broadcast %29 : i1 to vector<16x128xi1>
    %31 = vector.broadcast %30 : vector<16x128xi1> to vector<16x128xi1>
    %32 = arith.xori %28, %31 : vector<16x128xi1>
    %33 = arith.andi %32, %26 : vector<16x128xi1>
    %34 = vector.broadcast %22 : i32 to vector<16x128xi32>
    %35 = arith.addi %24, %34 : vector<16x128xi32>
    %36 = arith.select %33, %35, %24 : vector<16x128xi1>, vector<16x128xi32>
    %c0_i32_18 = arith.constant 0 : i32
    %37 = vector.broadcast %c0_i32_18 : i32 to vector<16x128xi32>
    %38 = arith.cmpi eq, %36, %37 : vector<16x128xi32>
    %c1_i32_19 = arith.constant 1 : i32
    %39 = tpu.dynamic_rotate %16 by %c1_i32_19 dim 0 : vector<16x128xf32>, i32 -> vector<16x128xf32>
    %cst_20 = arith.constant 0.000000e+00 : f32
    %40 = vector.broadcast %cst_20 : f32 to vector<16x128xf32>
    %41 = arith.select %38, %40, %39 : vector<16x128xi1>, vector<16x128xf32>
    %42 = arith.addf %13, %41 : vector<16x128xf32>
    %c15_i32 = arith.constant 15 : i32
    %43 = vector.broadcast %c15_i32 : i32 to vector<16x128xi32>
    %44 = arith.cmpi eq, %36, %43 : vector<16x128xi32>
    %c15_i32_21 = arith.constant 15 : i32
    %45 = tpu.dynamic_rotate %19 by %c15_i32_21 dim 0 : vector<16x128xf32>, i32 -> vector<16x128xf32>
    %cst_22 = arith.constant 0.000000e+00 : f32
    %46 = vector.broadcast %cst_22 : f32 to vector<16x128xf32>
    %47 = arith.select %44, %46, %45 : vector<16x128xi1>, vector<16x128xf32>
    %48 = arith.addf %42, %47 : vector<16x128xf32>
    %cst_23 = arith.constant dense<0.000000e+00> : vector<128xf32>
    %49 = vector.multi_reduction <add>, %48, %cst_23 [0] : vector<16x128xf32> to vector<128xf32>
    %50 = vector.shape_cast %49 : vector<128xf32> to vector<1x128xf32>
    %51 = arith.mulf %48, %48 : vector<16x128xf32>
    %cst_24 = arith.constant dense<0.000000e+00> : vector<128xf32>
    %52 = vector.multi_reduction <add>, %51, %cst_24 [0] : vector<16x128xf32> to vector<128xf32>
    %53 = vector.shape_cast %52 : vector<128xf32> to vector<1x128xf32>
    %54 = tpu.concatenate %50, %53 in 0 : vector<1x128xf32>, vector<1x128xf32> -> vector<2x128xf32>
    %c0_25 = arith.constant 0 : index
    %c0_26 = arith.constant 0 : index
    %c0_27 = arith.constant 0 : index
    %55 = vector.load %arg6[%c0_25, %c0_26, %c0_27] : memref<1x2x128xf32, #tpu.memory_space<vmem>>, vector<1x2x128xf32>
    %56 = vector.shape_cast %55 : vector<1x2x128xf32> to vector<2x128xf32>
    %57 = vector.shape_cast %54 : vector<2x128xf32> to vector<1x2x128xf32>
    tpu.vector_store %arg6[%c0_25, %c0_26, %c0_27], %57 {strides = array<i32>} : memref<1x2x128xf32, #tpu.memory_space<vmem>>, vector<1x2x128xf32>,
    %58 = arith.truncf %48 : vector<16x128xf32> to vector<16x128xbf16>
    %c0_28 = arith.constant 0 : index
    %c0_29 = arith.constant 0 : index
    %59 = vector.load %arg5[%c0_28, %c0_29] : memref<16x128xbf16, #tpu.memory_space<vmem>>, vector<16x128xbf16>
    tpu.vector_store %arg5[%c0_28, %c0_29], %58 {strides = array<i32>} : memref<16x128xbf16, #tpu.memory_space<vmem>>, vector<16x128xbf16>,
    return
  }
  func.func @transform_0(%arg0: i32) -> (i32, i32) {
    %c0_i32 = arith.constant 0 : i32
    %c0_i32_0 = arith.constant 0 : i32
    return %arg0, %c0_i32 : i32, i32
  }
  func.func @transform_1(%arg0: i32) -> (i32, i32) {
    %c0_i32 = arith.constant 0 : i32
    %c0_i32_0 = arith.constant 0 : i32
    %c0_i32_1 = arith.constant 0 : i32
    return %c0_i32, %c0_i32_0 : i32, i32
  }
  func.func @transform_2(%arg0: i32) -> (i32, i32) {
    %c0_i32 = arith.constant 0 : i32
    %c0_i32_0 = arith.constant 0 : i32
    %c0_i32_1 = arith.constant 0 : i32
    return %c0_i32, %c0_i32_0 : i32, i32
  }
  func.func @transform_3(%arg0: i32) -> (i32, i32, i32) {
    %c0_i32 = arith.constant 0 : i32
    %c0_i32_0 = arith.constant 0 : i32
    %c0_i32_1 = arith.constant 0 : i32
    %c0_i32_2 = arith.constant 0 : i32
    return %c0_i32, %c0_i32_0, %c0_i32_1 : i32, i32, i32
  }
  func.func @transform_4(%arg0: i32) -> (i32, i32) {
    %c0_i32 = arith.constant 0 : i32
    %c0_i32_0 = arith.constant 0 : i32
    return %arg0, %c0_i32 : i32, i32
  }
  func.func @transform_5(%arg0: i32) -> (i32, i32, i32) {
    %c0_i32 = arith.constant 0 : i32
    %c0_i32_0 = arith.constant 0 : i32
    %c0_i32_1 = arith.constant 0 : i32
    return %arg0, %c0_i32, %c0_i32_0 : i32, i32, i32
  }
}

module attributes {stable_mosaic.version = 11 : i64} {
  func.func @bn_add_relu_kernel(%arg0: i32, %arg1: memref<16x128xbf16, #tpu.memory_space<vmem>>, %arg2: memref<1x128xf32, #tpu.memory_space<vmem>>, %arg3: memref<1x128xf32, #tpu.memory_space<vmem>>, %arg4: memref<16x128xf32, #tpu.memory_space<vmem>>, %arg5: memref<16x128xf32, #tpu.memory_space<vmem>>) attributes {dimension_semantics = [#tpu.dimension_semantics<parallel>], iteration_bounds = array<i64: 1>, scalar_prefetch = 0 : i64, scratch_operands = 0 : i64, tpu.core_type = #tpu.core_type<tc>, window_params = [{transform_indices = @transform_0, window_bounds = array<i64: 16, 128>}, {pipeline_mode = #tpu.pipeline_mode<synchronous>, transform_indices = @transform_1, window_bounds = array<i64: 1, 128>}, {pipeline_mode = #tpu.pipeline_mode<synchronous>, transform_indices = @transform_2, window_bounds = array<i64: 1, 128>}, {transform_indices = @transform_3, window_bounds = array<i64: 16, 128>}, {transform_indices = @transform_4, window_bounds = array<i64: 16, 128>}]} {
    %c0 = arith.constant 0 : index
    %c0_0 = arith.constant 0 : index
    %0 = vector.load %arg1[%c0, %c0_0] : memref<16x128xbf16, #tpu.memory_space<vmem>>, vector<16x128xbf16>
    %1 = arith.extf %0 : vector<16x128xbf16> to vector<16x128xf32>
    %c0_1 = arith.constant 0 : index
    %c0_2 = arith.constant 0 : index
    %2 = vector.load %arg2[%c0_1, %c0_2] : memref<1x128xf32, #tpu.memory_space<vmem>>, vector<1x128xf32>
    %3 = vector.broadcast %2 : vector<1x128xf32> to vector<16x128xf32>
    %4 = arith.mulf %1, %3 : vector<16x128xf32>
    %c0_3 = arith.constant 0 : index
    %c0_4 = arith.constant 0 : index
    %5 = vector.load %arg3[%c0_3, %c0_4] : memref<1x128xf32, #tpu.memory_space<vmem>>, vector<1x128xf32>
    %6 = vector.broadcast %5 : vector<1x128xf32> to vector<16x128xf32>
    %7 = arith.addf %4, %6 : vector<16x128xf32>
    %c0_5 = arith.constant 0 : index
    %c0_6 = arith.constant 0 : index
    %8 = vector.load %arg4[%c0_5, %c0_6] : memref<16x128xf32, #tpu.memory_space<vmem>>, vector<16x128xf32>
    %9 = arith.addf %7, %8 : vector<16x128xf32>
    %cst = arith.constant 0.000000e+00 : f32
    %10 = vector.broadcast %cst : f32 to vector<16x128xf32>
    %11 = arith.maximumf %9, %10 : vector<16x128xf32>
    %c0_7 = arith.constant 0 : index
    %c0_8 = arith.constant 0 : index
    %12 = vector.load %arg5[%c0_7, %c0_8] : memref<16x128xf32, #tpu.memory_space<vmem>>, vector<16x128xf32>
    tpu.vector_store %arg5[%c0_7, %c0_8], %11 {strides = array<i32>} : memref<16x128xf32, #tpu.memory_space<vmem>>, vector<16x128xf32>,
    return
  }
  func.func @transform_0(%arg0: i32) -> (i32, i32) {
    %c0_i32 = arith.constant 0 : i32
    %c0_i32_0 = arith.constant 0 : i32
    return %arg0, %c0_i32 : i32, i32
  }
  func.func @transform_1(%arg0: i32) -> (i32, i32) {
    %c0_i32 = arith.constant 0 : i32
    %c0_i32_0 = arith.constant 0 : i32
    %c0_i32_1 = arith.constant 0 : i32
    return %c0_i32, %c0_i32_0 : i32, i32
  }
  func.func @transform_2(%arg0: i32) -> (i32, i32) {
    %c0_i32 = arith.constant 0 : i32
    %c0_i32_0 = arith.constant 0 : i32
    %c0_i32_1 = arith.constant 0 : i32
    return %c0_i32, %c0_i32_0 : i32, i32
  }
  func.func @transform_3(%arg0: i32) -> (i32, i32) {
    %c0_i32 = arith.constant 0 : i32
    %c0_i32_0 = arith.constant 0 : i32
    return %arg0, %c0_i32 : i32, i32
  }
  func.func @transform_4(%arg0: i32) -> (i32, i32) {
    %c0_i32 = arith.constant 0 : i32
    %c0_i32_0 = arith.constant 0 : i32
    return %arg0, %c0_i32 : i32, i32
  }
}

</mosaic_0001>

<llo_original>
// kernel: tile.23
$region0: #{tile.23}
  #allocation0 [shape = 's32[1]{0}', space=sflag, size = 0x4, scoped, tag = 'scoped memory for tile.23']
  %s0 = inlined_call_operand.vmem [shape: f32[4], index: 0, kind: input, shape index: {}]
  %s1 = inlined_call_operand.vmem [shape: f32[32,4], index: 1, kind: output, shape index: {}]
  // Predicated region
  $region2: #{tile.23} parent=0 // pred_check
    _
  $region3: #{tile.23} parent=0 // pred_check_branch
    %3 = sbr.rel (0) target = $region5
  $region4: #{tile.23} parent=0 // pred_region
    _
  $region5: #{tile.23} parent=0 // pred_fallthru
    _
  %v4 = vld [vmem:[%s0] ss:$0 sm:$0xff]
  %5 = vst [vmem:[%s1] sm:$0xff] %v4
  %s6 = scalar_lea.vmem %s1, 8
  %7 = vst [vmem:[%s6] sm:$0xff] %v4
  %s8 = scalar_lea.vmem %s1, 16
  %9 = vst [vmem:[%s8] sm:$0xff] %v4
  %s10 = scalar_lea.vmem %s1, 24
  %11 = vst [vmem:[%s10] sm:$0xff] %v4

// kernel: tile.24
$region0: #{tile.24}
  %s0 = inlined_call_operand.vmem [shape: f32[32,4], index: 0, kind: input, shape index: {}]
  %s1 = inlined_call_operand.vmem [shape: f32[1,128], index: 1, kind: output, shape index: {}]
  $region1: #{tile.24} parent=0
    #allocation0 [shape = 'u8[4096]{0}', space=vmem, size = 0x1000, scoped, tag = 'scoped mem for output reshape']
    %v2 = vld [vmem:[%s0] sm:$0x1]
    %vm3 = vcmask 31744
    %4 = vst.msk [vmem:[#allocation0] sm:$0x1] %vm3, %v2
    %s5 = scalar_lea.vmem %s0, 31
    %v6 = vld [vmem:[%s5] sm:$0x1]
    %7 = vrot.lane.b32.xlu0 %v6, 124
    %v8 = vpop.permute.xlu0 %7
    %vm9 = vcmask 1048544
    %10 = vst.msk [vmem:[#allocation0] sm:$0x1] %vm9, %v8
    %s11 = scalar_lea.vmem %s0, 30
    %v12 = vld [vmem:[%s11] sm:$0x1]
    %13 = vrot.lane.b32.xlu0 %v12, 120
    %v14 = vpop.permute.xlu0 %13
    %vm15 = vcmask 1015744
    %16 = vst.msk [vmem:[#allocation0] sm:$0x1] %vm15, %v14
    %s17 = scalar_lea.vmem %s0, 29
    %v18 = vld [vmem:[%s17] sm:$0x1]
    %19 = vrot.lane.b32.xlu0 %v18, 116
    %v20 = vpop.permute.xlu0 %19
    %vm21 = vcmask 982944
    %22 = vst.msk [vmem:[#allocation0] sm:$0x1] %vm21, %v20
    %s23 = scalar_lea.vmem %s0, 28
    %v24 = vld [vmem:[%s23] sm:$0x1]
    %25 = vrot.lane.b32.xlu0 %v24, 112
    %v26 = vpop.permute.xlu0 %25
    %vm27 = vcmask 950144
    %28 = vst.msk [vmem:[#allocation0] sm:$0x1] %vm27, %v26
    %s29 = scalar_lea.vmem %s0, 27
    %v30 = vld [vmem:[%s29] sm:$0x1]
    %31 = vrot.lane.b32.xlu0 %v30, 108
    %v32 = vpop.permute.xlu0 %31
    %vm33 = vcmask 917344
    %34 = vst.msk [vmem:[#allocation0] sm:$0x1] %vm33, %v32
    %s35 = scalar_lea.vmem %s0, 26
    %v36 = vld [vmem:[%s35] sm:$0x1]
    %37 = vrot.lane.b32.xlu0 %v36, 104
    %v38 = vpop.permute.xlu0 %37
    %vm39 = vcmask 884544
    %40 = vst.msk [vmem:[#allocation0] sm:$0x1] %vm39, %v38
    %s41 = scalar_lea.vmem %s0, 25
    %v42 = vld [vmem:[%s41] sm:$0x1]
    %43 = vrot.lane.b32.xlu0 %v42, 100
    %v44 = vpop.permute.xlu0 %43
    %vm45 = vcmask 851744
    %46 = vst.msk [vmem:[#allocation0] sm:$0x1] %vm45, %v44
    %s47 = scalar_lea.vmem %s0, 24
    %v48 = vld [vmem:[%s47] sm:$0x1]
    %49 = vrot.lane.b32.xlu0 %v48, 96
    %v50 = vpop.permute.xlu0 %49
    %vm51 = vcmask 818944
    %52 = vst.msk [vmem:[#allocation0] sm:$0x1] %vm51, %v50
    %s53 = scalar_lea.vmem %s0, 23
    %v54 = vld [vmem:[%s53] sm:$0x1]
    %55 = vrot.lane.b32.xlu0 %v54, 92
    %v56 = vpop.permute.xlu0 %55
    %vm57 = vcmask 786144
    %58 = vst.msk [vmem:[#allocation0] sm:$0x1] %vm57, %v56
    %s59 = scalar_lea.vmem %s0, 22
    %v60 = vld [vmem:[%s59] sm:$0x1]
    %61 = vrot.lane.b32.xlu0 %v60, 88
    %v62 = vpop.permute.xlu0 %61
    %vm63 = vcmask 753344
    %64 = vst.msk [vmem:[#allocation0] sm:$0x1] %vm63, %v62
    %s65 = scalar_lea.vmem %s0, 21
    %v66 = vld [vmem:[%s65] sm:$0x1]
    %67 = vrot.lane.b32.xlu0 %v66, 84
    %v68 = vpop.permute.xlu0 %67
    %vm69 = vcmask 720544
    %70 = vst.msk [vmem:[#allocation0] sm:$0x1] %vm69, %v68
    %s71 = scalar_lea.vmem %s0, 20
    %v72 = vld [vmem:[%s71] sm:$0x1]
    %73 = vrot.lane.b32.xlu0 %v72, 80
    %v74 = vpop.permute.xlu0 %73
    %vm75 = vcmask 687744
    %76 = vst.msk [vmem:[#allocation0] sm:$0x1] %vm75, %v74
    %s77 = scalar_lea.vmem %s0, 19
    %v78 = vld [vmem:[%s77] sm:$0x1]
    %79 = vrot.lane.b32.xlu0 %v78, 76
    %v80 = vpop.permute.xlu0 %79
    %vm81 = vcmask 654944
    %82 = vst.msk [vmem:[#allocation0] sm:$0x1] %vm81, %v80
    %s83 = scalar_lea.vmem %s0, 18
    %v84 = vld [vmem:[%s83] sm:$0x1]
    %85 = vrot.lane.b32.xlu0 %v84, 72
    %v86 = vpop.permute.xlu0 %85
    %vm87 = vcmask 622144
    %88 = vst.msk [vmem:[#allocation0] sm:$0x1] %vm87, %v86
    %s89 = scalar_lea.vmem %s0, 17
    %v90 = vld [vmem:[%s89] sm:$0x1]
    %91 = vrot.lane.b32.xlu0 %v90, 68
    %v92 = vpop.permute.xlu0 %91
    %vm93 = vcmask 589344
    %94 = vst.msk [vmem:[#allocation0] sm:$0x1] %vm93, %v92
    %s95 = scalar_lea.vmem %s0, 16
    %v96 = vld [vmem:[%s95] sm:$0x1]
    %97 = vrot.lane.b32.xlu0 %v96, 64
    %v98 = vpop.permute.xlu0 %97
    %vm99 = vcmask 556544
    %100 = vst.msk [vmem:[#allocation0] sm:$0x1] %vm99, %v98
    %s101 = scalar_lea.vmem %s0, 15
    %v102 = vld [vmem:[%s101] sm:$0x1]
    %103 = vrot.lane.b32.xlu0 %v102, 60
    %v104 = vpop.permute.xlu0 %103
    %vm105 = vcmask 523744
    %106 = vst.msk [vmem:[#allocation0] sm:$0x1] %vm105, %v104
    %s107 = scalar_lea.vmem %s0, 14
    %v108 = vld [vmem:[%s107] sm:$0x1]
    %109 = vrot.lane.b32.xlu0 %v108, 56
    %v110 = vpop.permute.xlu0 %109
    %vm111 = vcmask 490944
    %112 = vst.msk [vmem:[#allocation0] sm:$0x1] %vm111, %v110
    %s113 = scalar_lea.vmem %s0, 13
    %v114 = vld [vmem:[%s113] sm:$0x1]
    %115 = vrot.lane.b32.xlu0 %v114, 52
    %v116 = vpop.permute.xlu0 %115
    %vm117 = vcmask 458144
    %118 = vst.msk [vmem:[#allocation0] sm:$0x1] %vm117, %v116
    %s119 = scalar_lea.vmem %s0, 12
    %v120 = vld [vmem:[%s119] sm:$0x1]
    %121 = vrot.lane.b32.xlu0 %v120, 48
    %v122 = vpop.permute.xlu0 %121
    %vm123 = vcmask 425344
    %124 = vst.msk [vmem:[#allocation0] sm:$0x1] %vm123, %v122
    %s125 = scalar_lea.vmem %s0, 11
    %v126 = vld [vmem:[%s125] sm:$0x1]
    %127 = vrot.lane.b32.xlu0 %v126, 44
    %v128 = vpop.permute.xlu0 %127
    %vm129 = vcmask 392544
    %130 = vst.msk [vmem:[#allocation0] sm:$0x1] %vm129, %v128
    %s131 = scalar_lea.vmem %s0, 10
    %v132 = vld [vmem:[%s131] sm:$0x1]
    %133 = vrot.lane.b32.xlu0 %v132, 40
    %v134 = vpop.permute.xlu0 %133
    %vm135 = vcmask 359744
    %136 = vst.msk [vmem:[#allocation0] sm:$0x1] %vm135, %v134
    %s137 = scalar_lea.vmem %s0, 9
    %v138 = vld [vmem:[%s137] sm:$0x1]
    %139 = vrot.lane.b32.xlu0 %v138, 36
    %v140 = vpop.permute.xlu0 %139
    %vm141 = vcmask 326944
    %142 = vst.msk [vmem:[#allocation0] sm:$0x1] %vm141, %v140
    %s143 = scalar_lea.vmem %s0, 8
    %v144 = vld [vmem:[%s143] sm:$0x1]
    %145 = vrot.lane.b32.xlu0 %v144, 32
    %v146 = vpop.permute.xlu0 %145
    %vm147 = vcmask 294144
    %148 = vst.msk [vmem:[#allocation0] sm:$0x1] %vm147, %v146
    %s149 = scalar_lea.vmem %s0, 7
    %v150 = vld [vmem:[%s149] sm:$0x1]
    %151 = vrot.lane.b32.xlu0 %v150, 28
    %v152 = vpop.permute.xlu0 %151
    %vm153 = vcmask 261344
    %154 = vst.msk [vmem:[#allocation0] sm:$0x1] %vm153, %v152
    %s155 = scalar_lea.vmem %s0, 6
    %v156 = vld [vmem:[%s155] sm:$0x1]
    %157 = vrot.lane.b32.xlu0 %v156, 24
    %v158 = vpop.permute.xlu0 %157
    %vm159 = vcmask 228544
    %160 = vst.msk [vmem:[#allocation0] sm:$0x1] %vm159, %v158
    %s161 = scalar_lea.vmem %s0, 5
    %v162 = vld [vmem:[%s161] sm:$0x1]
    %163 = vrot.lane.b32.xlu0 %v162, 20
    %v164 = vpop.permute.xlu0 %163
    %vm165 = vcmask 195744
    %166 = vst.msk [vmem:[#allocation0] sm:$0x1] %vm165, %v164
    %s167 = scalar_lea.vmem %s0, 4
    %v168 = vld [vmem:[%s167] sm:$0x1]
    %169 = vrot.lane.b32.xlu0 %v168, 16
    %v170 = vpop.permute.xlu0 %169
    %vm171 = vcmask 162944
    %172 = vst.msk [vmem:[#allocation0] sm:$0x1] %vm171, %v170
    %s173 = scalar_lea.vmem %s0, 3
    %v174 = vld [vmem:[%s173] sm:$0x1]
    %175 = vrot.lane.b32.xlu0 %v174, 12
    %v176 = vpop.permute.xlu0 %175
    %vm177 = vcmask 130144
    %178 = vst.msk [vmem:[#allocation0] sm:$0x1] %vm177, %v176
    %s179 = scalar_lea.vmem %s0, 2
    %v180 = vld [vmem:[%s179] sm:$0x1]
    %181 = vrot.lane.b32.xlu0 %v180, 8
    %v182 = vpop.permute.xlu0 %181
    %vm183 = vcmask 97344
    %184 = vst.msk [vmem:[#allocation0] sm:$0x1] %vm183, %v182
    %s185 = scalar_lea.vmem %s0, 1
    %v186 = vld [vmem:[%s185] sm:$0x1]
    %187 = vrot.lane.b32.xlu0 %v186, 4
    %v188 = vpop.permute.xlu0 %187
    %vm189 = vcmask 64544
    %190 = vst.msk [vmem:[#allocation0] sm:$0x1] %vm189, %v188
    %s192 = sshll.u32 1, 1
    %s193 = ssub.s32 %s192, 1
    %v195 = vld [vmem:[#allocation0] sm:%s193]
    %s196 = sshll.u32 1, 1
    %s197 = ssub.s32 %s196, 1
    %198 = vst [vmem:[%s1] sm:%s197] %v195

// kernel: residual_block.3
$region0: #{residual_block.3}
  #allocation0 [shape = 'u32[]', space=smem, size = 0x4, offset = 0x4, fixed_abs, tag = 'smem constant byte address 0x4 - core index']
  #allocation1 [shape = 'u32[144,128]{1,0:T(1,128)}', space=vmem, size = 0x12000, scoped, tag = 'internal scratch']
  %s0 = inlined_call_operand.vmem [shape: f32[16,128], index: 0, kind: input, shape index: {}]
  %s1 = inlined_call_operand.vmem [shape: bf16[3,128,128], index: 1, kind: input, shape index: {}]
  %s2 = inlined_call_operand.vmem [shape: bf16[16,128], index: 2, kind: output, shape index: {0}]
  %s3 = inlined_call_operand.vmem [shape: f32[1,2,128], index: 3, kind: output, shape index: {1}]
  %4 = xla_tuple %s2, %s3
  %s5 = sld [smem:[#allocation0]]
  $region26: #{residual_block.3} parent=0
    _
  %s7 = ssub.s32 1, %s5
  %s8 = scalar_select 0, %s7, %s5
  // Predicated region
  $region2: #{residual_block.3} parent=0 // pred_check
    _
  $region3: #{residual_block.3} parent=0 // pred_check_branch
    %10 = sbr.rel (0) target = $region5
  $region4: #{residual_block.3} parent=0 // pred_region
    _
  $region5: #{residual_block.3} parent=0 // pred_fallthru
    _
  // Predicated region
  $region6: #{residual_block.3} parent=0 // pred_check
    _
  $region7: #{residual_block.3} parent=0 // pred_check_branch
    %12 = sbr.rel (0) target = $region9
  $region8: #{residual_block.3} parent=0 // pred_region
    _
  $region9: #{residual_block.3} parent=0 // pred_fallthru
    _
  %v14 = vld [vmem:[%s0] sm:$0xff]
  %v15 = vld [vmem:[%s0 + $0x8] sm:$0xff]
  %v16 = vpack.c.bf16 %v15, %v14
  %s17 = scalar_lea.vmem %s1, 64
  %v18 = vld [vmem:[%s17] sm:$0xf]
  %v19 = vld [vmem:[%s17 + $0x4] sm:$0xf]
  %v20 = vld [vmem:[%s17 + $0x8] sm:$0xf]
  %v21 = vld [vmem:[%s17 + $0xc] sm:$0xf]
  %v22 = vld [vmem:[%s17 + $0x10] sm:$0xf]
  %v23 = vld [vmem:[%s17 + $0x14] sm:$0xf]
  %v24 = vld [vmem:[%s17 + $0x18] sm:$0xf]
  %v25 = vld [vmem:[%s17 + $0x1c] sm:$0xf]
  %v26 = vld [vmem:[%s17 + $0x20] sm:$0xf]
  %v27 = vld [vmem:[%s17 + $0x24] sm:$0xf]
  %v28 = vld [vmem:[%s17 + $0x28] sm:$0xf]
  %v29 = vld [vmem:[%s17 + $0x2c] sm:$0xf]
  %v30 = vld [vmem:[%s17 + $0x30] sm:$0xf]
  %v31 = vld [vmem:[%s17 + $0x34] sm:$0xf]
  %v32 = vld [vmem:[%s17 + $0x38] sm:$0xf]
  %v33 = vld [vmem:[%s17 + $0x3c] sm:$0xf]
  %v34 = vld [vmem:[%s1] sm:$0xf]
  %v35 = vld [vmem:[%s1 + $0x4] sm:$0xf]
  %v36 = vld [vmem:[%s1 + $0x8] sm:$0xf]
  %v37 = vld [vmem:[%s1 + $0xc] sm:$0xf]
  %v38 = vld [vmem:[%s1 + $0x10] sm:$0xf]
  %v39 = vld [vmem:[%s1 + $0x14] sm:$0xf]
  %v40 = vld [vmem:[%s1 + $0x18] sm:$0xf]
  %v41 = vld [vmem:[%s1 + $0x1c] sm:$0xf]
  %v42 = vld [vmem:[%s1 + $0x20] sm:$0xf]
  %v43 = vld [vmem:[%s1 + $0x24] sm:$0xf]
  %v44 = vld [vmem:[%s1 + $0x28] sm:$0xf]
  %v45 = vld [vmem:[%s1 + $0x2c] sm:$0xf]
  %v46 = vld [vmem:[%s1 + $0x30] sm:$0xf]
  %v47 = vld [vmem:[%s1 + $0x34] sm:$0xf]
  %v48 = vld [vmem:[%s1 + $0x38] sm:$0xf]
  %v49 = vld [vmem:[%s1 + $0x3c] sm:$0xf]
  %v66 = vunpack.c.l.b16 %v34
  %v67 = vunpack.c.l.b16 %v35
  %v68 = vunpack.c.l.b16 %v36
  %v69 = vunpack.c.l.b16 %v37
  %v70 = vunpack.c.l.b16 %v38
  %v71 = vunpack.c.l.b16 %v39
  %v72 = vunpack.c.l.b16 %v40
  %v73 = vunpack.c.l.b16 %v41
  %v74 = vunpack.c.l.b16 %v42
  %v75 = vunpack.c.l.b16 %v43
  %v76 = vunpack.c.l.b16 %v44
  %v77 = vunpack.c.l.b16 %v45
  %v78 = vunpack.c.l.b16 %v46
  %v79 = vunpack.c.l.b16 %v47
  %v80 = vunpack.c.l.b16 %v48
  %v81 = vunpack.c.l.b16 %v49
  %v82 = vpack.c.b16 %v67, %v66
  %v83 = vpack.c.b16 %v69, %v68
  %v84 = vpack.c.b16 %v71, %v70
  %v85 = vpack.c.b16 %v73, %v72
  %v86 = vpack.c.b16 %v75, %v74
  %v87 = vpack.c.b16 %v77, %v76
  %v88 = vpack.c.b16 %v79, %v78
  %v89 = vpack.c.b16 %v81, %v80
  %98 = vmatprep.subr.bf16.mxu0 0
  %99 = vmatpush1.bf16.msra.mxu0 %v89
  %100 = vmatprep.subr.bf16.mxu0 0
  %101 = vmatpush1.bf16.msra.mxu0 %v88
  %102 = vmatprep.subr.bf16.mxu0 0
  %103 = vmatpush1.bf16.msra.mxu0 %v87
  %104 = vmatprep.subr.bf16.mxu0 0
  %105 = vmatpush1.bf16.msra.mxu0 %v86
  %106 = vmatprep.subr.bf16.mxu0 0
  %107 = vmatpush1.bf16.msra.mxu0 %v85
  %108 = vmatprep.subr.bf16.mxu0 0
  %109 = vmatpush1.bf16.msra.mxu0 %v84
  %110 = vmatprep.subr.bf16.mxu0 0
  %111 = vmatpush1.bf16.msra.mxu0 %v83
  %112 = vmatprep.subr.bf16.mxu0 0
  %113 = vmatpush1.bf16.msra.mxu0 %v82
  %114 = vmatprep.subr.bf16.mxu0 0
  %115 = vmatpush2.bf16.msra.mxu0 0
  %116 = vmatprep.subr.bf16.mxu0 0
  %117 = vmatpush2.bf16.msra.mxu0 0
  %118 = vmatprep.subr.bf16.mxu0 0
  %119 = vmatpush2.bf16.msra.mxu0 0
  %120 = vmatprep.subr.bf16.mxu0 0
  %121 = vmatpush2.bf16.msra.mxu0 0
  %122 = vmatprep.subr.bf16.mxu0 0
  %123 = vmatpush2.bf16.msra.mxu0 0
  %124 = vmatprep.subr.bf16.mxu0 0
  %125 = vmatpush2.bf16.msra.mxu0 0
  %126 = vmatprep.subr.bf16.mxu0 0
  %127 = vmatpush2.bf16.msra.mxu0 0
  %128 = vmatprep.subr.bf16.mxu0 0
  %129 = vmatpush2.bf16.msra.mxu0 0
  %130 = vmatprep.mubr.bf16.mxu0 0
  %131 = vmatmul.mubr.bf16.gmra.mxu0 %v16
  %v132 = vpop.f32.mrf.mxu0
  %v133 = vadd.f32 0.0, %v132
  %v134 = vpop.f32.mrf.mxu0
  %v135 = vpop.f32.mrf.mxu0
  %v136 = vadd.f32 0.0, %v135
  %v137 = vpop.f32.mrf.mxu0
  %138 = vdwg.mxu0
  %s139 = scalar_lea.vmem %s1, 128
  %v140 = vld [vmem:[%s139] sm:$0xf]
  %v141 = vld [vmem:[%s139 + $0x4] sm:$0xf]
  %v142 = vld [vmem:[%s139 + $0x8] sm:$0xf]
  %v143 = vld [vmem:[%s139 + $0xc] sm:$0xf]
  %v144 = vld [vmem:[%s139 + $0x10] sm:$0xf]
  %v145 = vld [vmem:[%s139 + $0x14] sm:$0xf]
  %v146 = vld [vmem:[%s139 + $0x18] sm:$0xf]
  %v147 = vld [vmem:[%s139 + $0x1c] sm:$0xf]
  %v148 = vld [vmem:[%s139 + $0x20] sm:$0xf]
  %v149 = vld [vmem:[%s139 + $0x24] sm:$0xf]
  %v150 = vld [vmem:[%s139 + $0x28] sm:$0xf]
  %v151 = vld [vmem:[%s139 + $0x2c] sm:$0xf]
  %v152 = vld [vmem:[%s139 + $0x30] sm:$0xf]
  %v153 = vld [vmem:[%s139 + $0x34] sm:$0xf]
  %v154 = vld [vmem:[%s139 + $0x38] sm:$0xf]
  %v155 = vld [vmem:[%s139 + $0x3c] sm:$0xf]
  %v172 = vunpack.c.l.b16 %v140
  %v173 = vunpack.c.l.b16 %v141
  %v174 = vunpack.c.l.b16 %v142
  %v175 = vunpack.c.l.b16 %v143
  %v176 = vunpack.c.l.b16 %v144
  %v177 = vunpack.c.l.b16 %v145
  %v178 = vunpack.c.l.b16 %v146
  %v179 = vunpack.c.l.b16 %v147
  %v180 = vunpack.c.l.b16 %v148
  %v181 = vunpack.c.l.b16 %v149
  %v182 = vunpack.c.l.b16 %v150
  %v183 = vunpack.c.l.b16 %v151
  %v184 = vunpack.c.l.b16 %v152
  %v185 = vunpack.c.l.b16 %v153
  %v186 = vunpack.c.l.b16 %v154
  %v187 = vunpack.c.l.b16 %v155
  %v188 = vpack.c.b16 %v173, %v172
  %v189 = vpack.c.b16 %v175, %v174
  %v190 = vpack.c.b16 %v177, %v176
  %v191 = vpack.c.b16 %v179, %v178
  %v192 = vpack.c.b16 %v181, %v180
  %v193 = vpack.c.b16 %v183, %v182
  %v194 = vpack.c.b16 %v185, %v184
  %v195 = vpack.c.b16 %v187, %v186
  %204 = vmatprep.subr.bf16.mxu0 0
  %205 = vmatpush1.bf16.msra.mxu0 %v195
  %206 = vmatprep.subr.bf16.mxu0 0
  %207 = vmatpush1.bf16.msra.mxu0 %v194
  %208 = vmatprep.subr.bf16.mxu0 0
  %209 = vmatpush1.bf16.msra.mxu0 %v193
  %210 = vmatprep.subr.bf16.mxu0 0
  %211 = vmatpush1.bf16.msra.mxu0 %v192
  %212 = vmatprep.subr.bf16.mxu0 0
  %213 = vmatpush1.bf16.msra.mxu0 %v191
  %214 = vmatprep.subr.bf16.mxu0 0
  %215 = vmatpush1.bf16.msra.mxu0 %v190
  %216 = vmatprep.subr.bf16.mxu0 0
  %217 = vmatpush1.bf16.msra.mxu0 %v189
  %218 = vmatprep.subr.bf16.mxu0 0
  %219 = vmatpush1.bf16.msra.mxu0 %v188
  %220 = vmatprep.subr.bf16.mxu0 0
  %221 = vmatpush2.bf16.msra.mxu0 0
  %222 = vmatprep.subr.bf16.mxu0 0
  %223 = vmatpush2.bf16.msra.mxu0 0
  %224 = vmatprep.subr.bf16.mxu0 0
  %225 = vmatpush2.bf16.msra.mxu0 0
  %226 = vmatprep.subr.bf16.mxu0 0
  %227 = vmatpush2.bf16.msra.mxu0 0
  %228 = vmatprep.subr.bf16.mxu0 0
  %229 = vmatpush2.bf16.msra.mxu0 0
  %230 = vmatprep.subr.bf16.mxu0 0
  %231 = vmatpush2.bf16.msra.mxu0 0
  %232 = vmatprep.subr.bf16.mxu0 0
  %233 = vmatpush2.bf16.msra.mxu0 0
  %234 = vmatprep.subr.bf16.mxu0 0
  %235 = vmatpush2.bf16.msra.mxu0 0
  %236 = vmatprep.mubr.bf16.mxu0 0
  %237 = vmatmul.mubr.bf16.gmra.mxu0 %v16
  %v238 = vpop.f32.mrf.mxu0
  %v239 = vadd.f32 0.0, %v238
  %v240 = vpop.f32.mrf.mxu0
  %v241 = vpop.f32.mrf.mxu0
  %v242 = vadd.f32 0.0, %v241
  %v243 = vpop.f32.mrf.mxu0
  %244 = vdwg.mxu0
  %v245 = vlaneseq
  %v246 = vshrl.u32 %v245, 7
  %v247 = vadd.s32 %v246, 8
  %vm248 = vcmp.lt.s32.totalorder %v246, 0
  %v249 = vsub.s32 0, %v246
  %v250 = vsel %vm248, %v249, %v246
  %v251 = vshrl.u32 %v250, 4
  %v252 = vand.u32 %v250, 15
  %v253 = vsub.s32 0, %v252
  %v254 = vsel %vm248, %v253, %v252
  %vm255 = vcmp.lt.s32.totalorder %v247, 0
  %v256 = vsub.s32 0, %v247
  %v257 = vsel %vm255, %v256, %v247
  %v258 = vshrl.u32 %v257, 4
  %v259 = vand.u32 %v257, 15
  %v260 = vsub.s32 0, %v259
  %v261 = vsel %vm255, %v260, %v259
  %vm262 = vcmp.ne.s32.totalorder %v254, 0
  %vm263 = vcmp.ne.s32.totalorder %v261, 0
  %vm264 = vcmp.lt.s32.totalorder %v254, 0
  %vm265 = vcmp.lt.s32.totalorder %v261, 0
  %vm266 = vmand %vm264, %vm262
  %vm267 = vmand %vm265, %vm263
  %v268 = vadd.s32 %v254, 16
  %v269 = vadd.s32 %v261, 16
  %v270 = vsel %vm266, %v268, %v254
  %v271 = vsel %vm267, %v269, %v261
  %vm272 = vcmp.eq.s32.totalorder %v270, 0
  %vm273 = vcmp.eq.s32.totalorder %v271, 0
  %v274 = vrot.slane %v133, 7
  %v275 = vrot.slane %v136, 7
  %vm276 = vcmp.lt.s32.totalorder %v246, 1
  %v277 = vsel %vm276, %v274, %v275
  %v278 = vsel %vm276, %v275, %v274
  %v279 = vsel %vm272, 0.0, %v278
  %v280 = vsel %vm273, 0.0, %v277
  %v297 = vunpack.c.l.b16 %v18
  %v298 = vunpack.c.l.b16 %v19
  %v299 = vunpack.c.l.b16 %v20
  %v300 = vunpack.c.l.b16 %v21
  %v301 = vunpack.c.l.b16 %v22
  %v302 = vunpack.c.l.b16 %v23
  %v303 = vunpack.c.l.b16 %v24
  %v304 = vunpack.c.l.b16 %v25
  %v305 = vunpack.c.l.b16 %v26
  %v306 = vunpack.c.l.b16 %v27
  %v307 = vunpack.c.l.b16 %v28
  %v308 = vunpack.c.l.b16 %v29
  %v309 = vunpack.c.l.b16 %v30
  %v310 = vunpack.c.l.b16 %v31
  %v311 = vunpack.c.l.b16 %v32
  %v312 = vunpack.c.l.b16 %v33
  %v313 = vpack.c.b16 %v298, %v297
  %v314 = vpack.c.b16 %v300, %v299
  %v315 = vpack.c.b16 %v302, %v301
  %v316 = vpack.c.b16 %v304, %v303
  %v317 = vpack.c.b16 %v306, %v305
  %v318 = vpack.c.b16 %v308, %v307
  %v319 = vpack.c.b16 %v310, %v309
  %v320 = vpack.c.b16 %v312, %v311
  %329 = vmatprep.subr.bf16.mxu0 0
  %330 = vmatpush1.bf16.msra.mxu0 %v320
  %331 = vmatprep.subr.bf16.mxu0 0
  %332 = vmatpush1.bf16.msra.mxu0 %v319
  %333 = vmatprep.subr.bf16.mxu0 0
  %334 = vmatpush1.bf16.msra.mxu0 %v318
  %335 = vmatprep.subr.bf16.mxu0 0
  %336 = vmatpush1.bf16.msra.mxu0 %v317
  %337 = vmatprep.subr.bf16.mxu0 0
  %338 = vmatpush1.bf16.msra.mxu0 %v316
  %339 = vmatprep.subr.bf16.mxu0 0
  %340 = vmatpush1.bf16.msra.mxu0 %v315
  %341 = vmatprep.subr.bf16.mxu0 0
  %342 = vmatpush1.bf16.msra.mxu0 %v314
  %343 = vmatprep.subr.bf16.mxu0 0
  %344 = vmatpush1.bf16.msra.mxu0 %v313
  %345 = vmatprep.subr.bf16.mxu0 0
  %346 = vmatpush2.bf16.msra.mxu0 0
  %347 = vmatprep.subr.bf16.mxu0 0
  %348 = vmatpush2.bf16.msra.mxu0 0
  %349 = vmatprep.subr.bf16.mxu0 0
  %350 = vmatpush2.bf16.msra.mxu0 0
  %351 = vmatprep.subr.bf16.mxu0 0
  %352 = vmatpush2.bf16.msra.mxu0 0
  %353 = vmatprep.subr.bf16.mxu0 0
  %354 = vmatpush2.bf16.msra.mxu0 0
  %355 = vmatprep.subr.bf16.mxu0 0
  %356 = vmatpush2.bf16.msra.mxu0 0
  %357 = vmatprep.subr.bf16.mxu0 0
  %358 = vmatpush2.bf16.msra.mxu0 0
  %359 = vmatprep.subr.bf16.mxu0 0
  %360 = vmatpush2.bf16.msra.mxu0 0
  %361 = vmatprep.mubr.bf16.mxu0 0
  %362 = vmatmul.mubr.bf16.gmra.mxu0 %v16
  %v363 = vpop.f32.mrf.mxu0
  %v364 = vadd.f32 %v279, %v363
  %v365 = vpop.f32.mrf.mxu0
  %v366 = vpop.f32.mrf.mxu0
  %v367 = vadd.f32 %v280, %v366
  %v368 = vpop.f32.mrf.mxu0
  %369 = vdwg.mxu0
  %vm370 = vcmp.eq.s32.totalorder %v270, 15
  %vm371 = vcmp.eq.s32.totalorder %v271, 15
  %v372 = vrot.slane %v239, 1
  %v373 = vrot.slane %v242, 1
  %vm374 = vcmp.lt.s32.totalorder %v246, 7
  %v375 = vsel %vm374, %v372, %v373
  %v376 = vsel %vm374, %v373, %v372
  %v377 = vsel %vm370, 0.0, %v375
  %v378 = vsel %vm371, 0.0, %v376
  %v379 = vadd.f32 %v364, %v377
  %v380 = vadd.f32 %v367, %v378
  %v381 = vadd.f32 %v379, %v380
  %v382 = vrot.slane %v381, 4
  %v383 = vadd.f32 %v381, %v382
  %v384 = vrot.slane %v383, 2
  %v385 = vadd.f32 %v383, %v384
  %v386 = vrot.slane %v385, 1
  %v387 = vadd.f32 %v385, %v386
  %v388 = vmul.f32 %v379, %v379
  %v389 = vmul.f32 %v380, %v380
  %v390 = vadd.f32 %v388, %v389
  %v391 = vrot.slane %v390, 4
  %v392 = vadd.f32 %v390, %v391
  %v393 = vrot.slane %v392, 2
  %v394 = vadd.f32 %v392, %v393
  %v395 = vrot.slane %v394, 1
  %v396 = vadd.f32 %v394, %v395
  %vm397 = vcmask 1040384
  %v398 = vsel %vm397, %v387, %v396
  %399 = vst [vmem:[%s3] sm:$0x3] %v398
  %v400 = vpack.c.bf16 %v380, %v379
  %v402 = vunpack.c.l.b16 %v400
  %v403 = vunpack.c.h.b16 %v400
  %v404 = vpack.c.b16 %v402, %v402
  %v405 = vpack.c.b16 %v403, %v403
  %408 = vst [vmem:[%s2] sm:$0xf] %v404
  %409 = vst [vmem:[%s2 + $0x4] sm:$0xf] %v405
  // Predicated region
  $region10: #{residual_block.3} parent=0 // pred_check
    _
  $region11: #{residual_block.3} parent=0 // pred_check_branch
    %411 = sbr.rel (0) target = $region13
  $region12: #{residual_block.3} parent=0 // pred_region
    _
  $region13: #{residual_block.3} parent=0 // pred_fallthru
    _
  // Predicated region
  $region14: #{residual_block.3} parent=0 // pred_check
    _
  $region15: #{residual_block.3} parent=0 // pred_check_branch
    %413 = sbr.rel (0) target = $region17
  $region16: #{residual_block.3} parent=0 // pred_region
    _
  $region17: #{residual_block.3} parent=0 // pred_fallthru
    _
  // Predicated region
  $region18: #{residual_block.3} parent=0 // pred_check
    _
  $region19: #{residual_block.3} parent=0 // pred_check_branch
    %415 = sbr.rel (0) target = $region21
  $region20: #{residual_block.3} parent=0 // pred_region
    _
  $region21: #{residual_block.3} parent=0 // pred_fallthru
    _
  // Predicated region
  $region22: #{residual_block.3} parent=0 // pred_check
    _
  $region23: #{residual_block.3} parent=0 // pred_check_branch
    %417 = sbr.rel (0) target = $region25
  $region24: #{residual_block.3} parent=0 // pred_region
    _
  $region25: #{residual_block.3} parent=0 // pred_fallthru
    _

// kernel: residual_block.5
$region0: #{residual_block.5}
  #allocation0 [shape = 'u32[]', space=smem, size = 0x4, offset = 0x4, fixed_abs, tag = 'smem constant byte address 0x4 - core index']
  #allocation1 [shape = 'u32[144,128]{1,0:T(1,128)}', space=vmem, size = 0x12000, scoped, tag = 'internal scratch']
  %s0 = inlined_call_operand.vmem [shape: bf16[16,128], index: 0, kind: input, shape index: {}]
  %s1 = inlined_call_operand.vmem [shape: f32[1,128], index: 1, kind: input, shape index: {}]
  %s2 = inlined_call_operand.vmem [shape: f32[1,128], index: 2, kind: input, shape index: {}]
  %s3 = inlined_call_operand.vmem [shape: f32[16,128], index: 3, kind: input, shape index: {}]
  %s4 = inlined_call_operand.vmem [shape: f32[16,128], index: 4, kind: output, shape index: {}]
  %s5 = sld [smem:[#allocation0]]
  $region26: #{residual_block.5} parent=0
    _
  %s7 = ssub.s32 1, %s5
  %s8 = scalar_select 0, %s7, %s5
  // Predicated region
  $region2: #{residual_block.5} parent=0 // pred_check
    _
  $region3: #{residual_block.5} parent=0 // pred_check_branch
    %10 = sbr.rel (0) target = $region5
  $region4: #{residual_block.5} parent=0 // pred_region
    _
  $region5: #{residual_block.5} parent=0 // pred_fallthru
    _
  // Predicated region
  $region6: #{residual_block.5} parent=0 // pred_check
    _
  $region7: #{residual_block.5} parent=0 // pred_check_branch
    %12 = sbr.rel (0) target = $region9
  $region8: #{residual_block.5} parent=0 // pred_region
    _
  $region9: #{residual_block.5} parent=0 // pred_fallthru
    _
  // Predicated region
  $region10: #{residual_block.5} parent=0 // pred_check
    _
  $region11: #{residual_block.5} parent=0 // pred_check_branch
    %14 = sbr.rel (0) target = $region13
  $region12: #{residual_block.5} parent=0 // pred_region
    _
  $region13: #{residual_block.5} parent=0 // pred_fallthru
    _
  // Predicated region
  $region14: #{residual_block.5} parent=0 // pred_check
    _
  $region15: #{residual_block.5} parent=0 // pred_check_branch
    %16 = sbr.rel (0) target = $region17
  $region16: #{residual_block.5} parent=0 // pred_region
    _
  $region17: #{residual_block.5} parent=0 // pred_fallthru
    _
  %v17 = vld [vmem:[%s0] sm:$0xf]
  %v18 = vld [vmem:[%s0 + $0x4] sm:$0xf]
  %v19 = vunpack.c.l.bf16 %v17
  %v20 = vunpack.c.l.bf16 %v18
  %v21 = vld [vmem:[%s1] sm:$0x1]
  %v23 = vlaneseq
  %v24 = vshrl.u32 %v23, 7
  %v25 = vsub.s32 0, %v24
  %v26 = vrot.slane %v21, %v25
  %v28 = vmul.f32 %v19, %v26
  %v29 = vmul.f32 %v20, %v26
  %v30 = vld [vmem:[%s2] sm:$0x1]
  %v32 = vlaneseq
  %v33 = vshrl.u32 %v32, 7
  %v34 = vsub.s32 0, %v33
  %v35 = vrot.slane %v30, %v34
  %v37 = vadd.f32 %v28, %v35
  %v38 = vadd.f32 %v29, %v35
  %v39 = vld [vmem:[%s3] sm:$0xff]
  %v40 = vld [vmem:[%s3 + $0x8] sm:$0xff]
  %v41 = vadd.f32 %v37, %v39
  %v42 = vadd.f32 %v38, %v40
  %v43 = vmax.f32 %v41, 0.0
  %v44 = vmax.f32 %v42, 0.0
  %45 = vst [vmem:[%s4] sm:$0xff] %v43
  %46 = vst [vmem:[%s4 + $0x8] sm:$0xff] %v44
  // Predicated region
  $region18: #{residual_block.5} parent=0 // pred_check
    _
  $region19: #{residual_block.5} parent=0 // pred_check_branch
    %48 = sbr.rel (0) target = $region21
  $region20: #{residual_block.5} parent=0 // pred_region
    _
  $region21: #{residual_block.5} parent=0 // pred_fallthru
    _
  // Predicated region
  $region22: #{residual_block.5} parent=0 // pred_check
    _
  $region23: #{residual_block.5} parent=0 // pred_check_branch
    %50 = sbr.rel (0) target = $region25
  $region24: #{residual_block.5} parent=0 // pred_region
    _
  $region25: #{residual_block.5} parent=0 // pred_fallthru
    _

// kernel: residual_block.4
$region0: #{residual_block.4}
  #allocation0 [shape = 'u32[]', space=smem, size = 0x4, offset = 0x4, fixed_abs, tag = 'smem constant byte address 0x4 - core index']
  #allocation1 [shape = 'u32[144,128]{1,0:T(1,128)}', space=vmem, size = 0x12000, scoped, tag = 'internal scratch']
  %s0 = inlined_call_operand.vmem [shape: bf16[16,128], index: 0, kind: input, shape index: {}]
  %s1 = inlined_call_operand.vmem [shape: f32[1,128], index: 1, kind: input, shape index: {}]
  %s2 = inlined_call_operand.vmem [shape: f32[1,128], index: 2, kind: input, shape index: {}]
  %s3 = inlined_call_operand.vmem [shape: bf16[3,128,128], index: 3, kind: input, shape index: {}]
  %s4 = inlined_call_operand.vmem [shape: bf16[16,128], index: 4, kind: output, shape index: {0}]
  %s5 = inlined_call_operand.vmem [shape: f32[1,2,128], index: 5, kind: output, shape index: {1}]
  %6 = xla_tuple %s4, %s5
  %s7 = sld [smem:[#allocation0]]
  $region34: #{residual_block.4} parent=0
    _
  %s9 = ssub.s32 1, %s7
  %s10 = scalar_select 0, %s9, %s7
  // Predicated region
  $region2: #{residual_block.4} parent=0 // pred_check
    _
  $region3: #{residual_block.4} parent=0 // pred_check_branch
    %12 = sbr.rel (0) target = $region5
  $region4: #{residual_block.4} parent=0 // pred_region
    _
  $region5: #{residual_block.4} parent=0 // pred_fallthru
    _
  // Predicated region
  $region6: #{residual_block.4} parent=0 // pred_check
    _
  $region7: #{residual_block.4} parent=0 // pred_check_branch
    %14 = sbr.rel (0) target = $region9
  $region8: #{residual_block.4} parent=0 // pred_region
    _
  $region9: #{residual_block.4} parent=0 // pred_fallthru
    _
  // Predicated region
  $region10: #{residual_block.4} parent=0 // pred_check
    _
  $region11: #{residual_block.4} parent=0 // pred_check_branch
    %16 = sbr.rel (0) target = $region13
  $region12: #{residual_block.4} parent=0 // pred_region
    _
  $region13: #{residual_block.4} parent=0 // pred_fallthru
    _
  // Predicated region
  $region14: #{residual_block.4} parent=0 // pred_check
    _
  $region15: #{residual_block.4} parent=0 // pred_check_branch
    %18 = sbr.rel (0) target = $region17
  $region16: #{residual_block.4} parent=0 // pred_region
    _
  $region17: #{residual_block.4} parent=0 // pred_fallthru
    _
  %v20 = vld [vmem:[%s0] sm:$0xf]
  %v21 = vld [vmem:[%s0 + $0x4] sm:$0xf]
  %v22 = vunpack.c.l.bf16 %v20
  %v23 = vunpack.c.l.bf16 %v21
  %v24 = vld [vmem:[%s1] sm:$0x1]
  %v26 = vlaneseq
  %v27 = vshrl.u32 %v26, 7
  %v28 = vsub.s32 0, %v27
  %v29 = vrot.slane %v24, %v28
  %v31 = vmul.f32 %v22, %v29
  %v32 = vmul.f32 %v23, %v29
  %v33 = vld [vmem:[%s2] sm:$0x1]
  %v35 = vlaneseq
  %v36 = vshrl.u32 %v35, 7
  %v37 = vsub.s32 0, %v36
  %v38 = vrot.slane %v33, %v37
  %v40 = vadd.f32 %v31, %v38
  %v41 = vadd.f32 %v32, %v38
  %v42 = vmax.f32 %v40, 0.0
  %v43 = vmax.f32 %v41, 0.0
  %v44 = vpack.c.bf16 %v43, %v42
  %s45 = scalar_lea.vmem %s3, 64
  %v46 = vld [vmem:[%s45] sm:$0xf]
  %v47 = vld [vmem:[%s45 + $0x4] sm:$0xf]
  %v48 = vld [vmem:[%s45 + $0x8] sm:$0xf]
  %v49 = vld [vmem:[%s45 + $0xc] sm:$0xf]
  %v50 = vld [vmem:[%s45 + $0x10] sm:$0xf]
  %v51 = vld [vmem:[%s45 + $0x14] sm:$0xf]
  %v52 = vld [vmem:[%s45 + $0x18] sm:$0xf]
  %v53 = vld [vmem:[%s45 + $0x1c] sm:$0xf]
  %v54 = vld [vmem:[%s45 + $0x20] sm:$0xf]
  %v55 = vld [vmem:[%s45 + $0x24] sm:$0xf]
  %v56 = vld [vmem:[%s45 + $0x28] sm:$0xf]
  %v57 = vld [vmem:[%s45 + $0x2c] sm:$0xf]
  %v58 = vld [vmem:[%s45 + $0x30] sm:$0xf]
  %v59 = vld [vmem:[%s45 + $0x34] sm:$0xf]
  %v60 = vld [vmem:[%s45 + $0x38] sm:$0xf]
  %v61 = vld [vmem:[%s45 + $0x3c] sm:$0xf]
  %v62 = vld [vmem:[%s3] sm:$0xf]
  %v63 = vld [vmem:[%s3 + $0x4] sm:$0xf]
  %v64 = vld [vmem:[%s3 + $0x8] sm:$0xf]
  %v65 = vld [vmem:[%s3 + $0xc] sm:$0xf]
  %v66 = vld [vmem:[%s3 + $0x10] sm:$0xf]
  %v67 = vld [vmem:[%s3 + $0x14] sm:$0xf]
  %v68 = vld [vmem:[%s3 + $0x18] sm:$0xf]
  %v69 = vld [vmem:[%s3 + $0x1c] sm:$0xf]
  %v70 = vld [vmem:[%s3 + $0x20] sm:$0xf]
  %v71 = vld [vmem:[%s3 + $0x24] sm:$0xf]
  %v72 = vld [vmem:[%s3 + $0x28] sm:$0xf]
  %v73 = vld [vmem:[%s3 + $0x2c] sm:$0xf]
  %v74 = vld [vmem:[%s3 + $0x30] sm:$0xf]
  %v75 = vld [vmem:[%s3 + $0x34] sm:$0xf]
  %v76 = vld [vmem:[%s3 + $0x38] sm:$0xf]
  %v77 = vld [vmem:[%s3 + $0x3c] sm:$0xf]
  %v94 = vunpack.c.l.b16 %v62
  %v95 = vunpack.c.l.b16 %v63
  %v96 = vunpack.c.l.b16 %v64
  %v97 = vunpack.c.l.b16 %v65
  %v98 = vunpack.c.l.b16 %v66
  %v99 = vunpack.c.l.b16 %v67
  %v100 = vunpack.c.l.b16 %v68
  %v101 = vunpack.c.l.b16 %v69
  %v102 = vunpack.c.l.b16 %v70
  %v103 = vunpack.c.l.b16 %v71
  %v104 = vunpack.c.l.b16 %v72
  %v105 = vunpack.c.l.b16 %v73
  %v106 = vunpack.c.l.b16 %v74
  %v107 = vunpack.c.l.b16 %v75
  %v108 = vunpack.c.l.b16 %v76
  %v109 = vunpack.c.l.b16 %v77
  %v110 = vpack.c.b16 %v95, %v94
  %v111 = vpack.c.b16 %v97, %v96
  %v112 = vpack.c.b16 %v99, %v98
  %v113 = vpack.c.b16 %v101, %v100
  %v114 = vpack.c.b16 %v103, %v102
  %v115 = vpack.c.b16 %v105, %v104
  %v116 = vpack.c.b16 %v107, %v106
  %v117 = vpack.c.b16 %v109, %v108
  %126 = vmatprep.subr.bf16.mxu0 0
  %127 = vmatpush1.bf16.msra.mxu0 %v117
  %128 = vmatprep.subr.bf16.mxu0 0
  %129 = vmatpush1.bf16.msra.mxu0 %v116
  %130 = vmatprep.subr.bf16.mxu0 0
  %131 = vmatpush1.bf16.msra.mxu0 %v115
  %132 = vmatprep.subr.bf16.mxu0 0
  %133 = vmatpush1.bf16.msra.mxu0 %v114
  %134 = vmatprep.subr.bf16.mxu0 0
  %135 = vmatpush1.bf16.msra.mxu0 %v113
  %136 = vmatprep.subr.bf16.mxu0 0
  %137 = vmatpush1.bf16.msra.mxu0 %v112
  %138 = vmatprep.subr.bf16.mxu0 0
  %139 = vmatpush1.bf16.msra.mxu0 %v111
  %140 = vmatprep.subr.bf16.mxu0 0
  %141 = vmatpush1.bf16.msra.mxu0 %v110
  %142 = vmatprep.subr.bf16.mxu0 0
  %143 = vmatpush2.bf16.msra.mxu0 0
  %144 = vmatprep.subr.bf16.mxu0 0
  %145 = vmatpush2.bf16.msra.mxu0 0
  %146 = vmatprep.subr.bf16.mxu0 0
  %147 = vmatpush2.bf16.msra.mxu0 0
  %148 = vmatprep.subr.bf16.mxu0 0
  %149 = vmatpush2.bf16.msra.mxu0 0
  %150 = vmatprep.subr.bf16.mxu0 0
  %151 = vmatpush2.bf16.msra.mxu0 0
  %152 = vmatprep.subr.bf16.mxu0 0
  %153 = vmatpush2.bf16.msra.mxu0 0
  %154 = vmatprep.subr.bf16.mxu0 0
  %155 = vmatpush2.bf16.msra.mxu0 0
  %156 = vmatprep.subr.bf16.mxu0 0
  %157 = vmatpush2.bf16.msra.mxu0 0
  %158 = vmatprep.mubr.bf16.mxu0 0
  %159 = vmatmul.mubr.bf16.gmra.mxu0 %v44
  %v160 = vpop.f32.mrf.mxu0
  %v161 = vadd.f32 0.0, %v160
  %v162 = vpop.f32.mrf.mxu0
  %v163 = vpop.f32.mrf.mxu0
  %v164 = vadd.f32 0.0, %v163
  %v165 = vpop.f32.mrf.mxu0
  %166 = vdwg.mxu0
  %s167 = scalar_lea.vmem %s3, 128
  %v168 = vld [vmem:[%s167] sm:$0xf]
  %v169 = vld [vmem:[%s167 + $0x4] sm:$0xf]
  %v170 = vld [vmem:[%s167 + $0x8] sm:$0xf]
  %v171 = vld [vmem:[%s167 + $0xc] sm:$0xf]
  %v172 = vld [vmem:[%s167 + $0x10] sm:$0xf]
  %v173 = vld [vmem:[%s167 + $0x14] sm:$0xf]
  %v174 = vld [vmem:[%s167 + $0x18] sm:$0xf]
  %v175 = vld [vmem:[%s167 + $0x1c] sm:$0xf]
  %v176 = vld [vmem:[%s167 + $0x20] sm:$0xf]
  %v177 = vld [vmem:[%s167 + $0x24] sm:$0xf]
  %v178 = vld [vmem:[%s167 + $0x28] sm:$0xf]
  %v179 = vld [vmem:[%s167 + $0x2c] sm:$0xf]
  %v180 = vld [vmem:[%s167 + $0x30] sm:$0xf]
  %v181 = vld [vmem:[%s167 + $0x34] sm:$0xf]
  %v182 = vld [vmem:[%s167 + $0x38] sm:$0xf]
  %v183 = vld [vmem:[%s167 + $0x3c] sm:$0xf]
  %v200 = vunpack.c.l.b16 %v168
  %v201 = vunpack.c.l.b16 %v169
  %v202 = vunpack.c.l.b16 %v170
  %v203 = vunpack.c.l.b16 %v171
  %v204 = vunpack.c.l.b16 %v172
  %v205 = vunpack.c.l.b16 %v173
  %v206 = vunpack.c.l.b16 %v174
  %v207 = vunpack.c.l.b16 %v175
  %v208 = vunpack.c.l.b16 %v176
  %v209 = vunpack.c.l.b16 %v177
  %v210 = vunpack.c.l.b16 %v178
  %v211 = vunpack.c.l.b16 %v179
  %v212 = vunpack.c.l.b16 %v180
  %v213 = vunpack.c.l.b16 %v181
  %v214 = vunpack.c.l.b16 %v182
  %v215 = vunpack.c.l.b16 %v183
  %v216 = vpack.c.b16 %v201, %v200
  %v217 = vpack.c.b16 %v203, %v202
  %v218 = vpack.c.b16 %v205, %v204
  %v219 = vpack.c.b16 %v207, %v206
  %v220 = vpack.c.b16 %v209, %v208
  %v221 = vpack.c.b16 %v211, %v210
  %v222 = vpack.c.b16 %v213, %v212
  %v223 = vpack.c.b16 %v215, %v214
  %232 = vmatprep.subr.bf16.mxu0 0
  %233 = vmatpush1.bf16.msra.mxu0 %v223
  %234 = vmatprep.subr.bf16.mxu0 0
  %235 = vmatpush1.bf16.msra.mxu0 %v222
  %236 = vmatprep.subr.bf16.mxu0 0
  %237 = vmatpush1.bf16.msra.mxu0 %v221
  %238 = vmatprep.subr.bf16.mxu0 0
  %239 = vmatpush1.bf16.msra.mxu0 %v220
  %240 = vmatprep.subr.bf16.mxu0 0
  %241 = vmatpush1.bf16.msra.mxu0 %v219
  %242 = vmatprep.subr.bf16.mxu0 0
  %243 = vmatpush1.bf16.msra.mxu0 %v218
  %244 = vmatprep.subr.bf16.mxu0 0
  %245 = vmatpush1.bf16.msra.mxu0 %v217
  %246 = vmatprep.subr.bf16.mxu0 0
  %247 = vmatpush1.bf16.msra.mxu0 %v216
  %248 = vmatprep.subr.bf16.mxu0 0
  %249 = vmatpush2.bf16.msra.mxu0 0
  %250 = vmatprep.subr.bf16.mxu0 0
  %251 = vmatpush2.bf16.msra.mxu0 0
  %252 = vmatprep.subr.bf16.mxu0 0
  %253 = vmatpush2.bf16.msra.mxu0 0
  %254 = vmatprep.subr.bf16.mxu0 0
  %255 = vmatpush2.bf16.msra.mxu0 0
  %256 = vmatprep.subr.bf16.mxu0 0
  %257 = vmatpush2.bf16.msra.mxu0 0
  %258 = vmatprep.subr.bf16.mxu0 0
  %259 = vmatpush2.bf16.msra.mxu0 0
  %260 = vmatprep.subr.bf16.mxu0 0
  %261 = vmatpush2.bf16.msra.mxu0 0
  %262 = vmatprep.subr.bf16.mxu0 0
  %263 = vmatpush2.bf16.msra.mxu0 0
  %264 = vmatprep.mubr.bf16.mxu0 0
  %265 = vmatmul.mubr.bf16.gmra.mxu0 %v44
  %v266 = vpop.f32.mrf.mxu0
  %v267 = vadd.f32 0.0, %v266
  %v268 = vpop.f32.mrf.mxu0
  %v269 = vpop.f32.mrf.mxu0
  %v270 = vadd.f32 0.0, %v269
  %v271 = vpop.f32.mrf.mxu0
  %272 = vdwg.mxu0
  %v273 = vlaneseq
  %v274 = vshrl.u32 %v273, 7
  %v275 = vadd.s32 %v274, 8
  %vm276 = vcmp.lt.s32.totalorder %v274, 0
  %v277 = vsub.s32 0, %v274
  %v278 = vsel %vm276, %v277, %v274
  %v279 = vshrl.u32 %v278, 4
  %v280 = vand.u32 %v278, 15
  %v281 = vsub.s32 0, %v280
  %v282 = vsel %vm276, %v281, %v280
  %vm283 = vcmp.lt.s32.totalorder %v275, 0
  %v284 = vsub.s32 0, %v275
  %v285 = vsel %vm283, %v284, %v275
  %v286 = vshrl.u32 %v285, 4
  %v287 = vand.u32 %v285, 15
  %v288 = vsub.s32 0, %v287
  %v289 = vsel %vm283, %v288, %v287
  %vm290 = vcmp.ne.s32.totalorder %v282, 0
  %vm291 = vcmp.ne.s32.totalorder %v289, 0
  %vm292 = vcmp.lt.s32.totalorder %v282, 0
  %vm293 = vcmp.lt.s32.totalorder %v289, 0
  %vm294 = vmand %vm292, %vm290
  %vm295 = vmand %vm293, %vm291
  %v296 = vadd.s32 %v282, 16
  %v297 = vadd.s32 %v289, 16
  %v298 = vsel %vm294, %v296, %v282
  %v299 = vsel %vm295, %v297, %v289
  %vm300 = vcmp.eq.s32.totalorder %v298, 0
  %vm301 = vcmp.eq.s32.totalorder %v299, 0
  %v302 = vrot.slane %v161, 7
  %v303 = vrot.slane %v164, 7
  %vm304 = vcmp.lt.s32.totalorder %v274, 1
  %v305 = vsel %vm304, %v302, %v303
  %v306 = vsel %vm304, %v303, %v302
  %v307 = vsel %vm300, 0.0, %v306
  %v308 = vsel %vm301, 0.0, %v305
  %v325 = vunpack.c.l.b16 %v46
  %v326 = vunpack.c.l.b16 %v47
  %v327 = vunpack.c.l.b16 %v48
  %v328 = vunpack.c.l.b16 %v49
  %v329 = vunpack.c.l.b16 %v50
  %v330 = vunpack.c.l.b16 %v51
  %v331 = vunpack.c.l.b16 %v52
  %v332 = vunpack.c.l.b16 %v53
  %v333 = vunpack.c.l.b16 %v54
  %v334 = vunpack.c.l.b16 %v55
  %v335 = vunpack.c.l.b16 %v56
  %v336 = vunpack.c.l.b16 %v57
  %v337 = vunpack.c.l.b16 %v58
  %v338 = vunpack.c.l.b16 %v59
  %v339 = vunpack.c.l.b16 %v60
  %v340 = vunpack.c.l.b16 %v61
  %v341 = vpack.c.b16 %v326, %v325
  %v342 = vpack.c.b16 %v328, %v327
  %v343 = vpack.c.b16 %v330, %v329
  %v344 = vpack.c.b16 %v332, %v331
  %v345 = vpack.c.b16 %v334, %v333
  %v346 = vpack.c.b16 %v336, %v335
  %v347 = vpack.c.b16 %v338, %v337
  %v348 = vpack.c.b16 %v340, %v339
  %357 = vmatprep.subr.bf16.mxu0 0
  %358 = vmatpush1.bf16.msra.mxu0 %v348
  %359 = vmatprep.subr.bf16.mxu0 0
  %360 = vmatpush1.bf16.msra.mxu0 %v347
  %361 = vmatprep.subr.bf16.mxu0 0
  %362 = vmatpush1.bf16.msra.mxu0 %v346
  %363 = vmatprep.subr.bf16.mxu0 0
  %364 = vmatpush1.bf16.msra.mxu0 %v345
  %365 = vmatprep.subr.bf16.mxu0 0
  %366 = vmatpush1.bf16.msra.mxu0 %v344
  %367 = vmatprep.subr.bf16.mxu0 0
  %368 = vmatpush1.bf16.msra.mxu0 %v343
  %369 = vmatprep.subr.bf16.mxu0 0
  %370 = vmatpush1.bf16.msra.mxu0 %v342
  %371 = vmatprep.subr.bf16.mxu0 0
  %372 = vmatpush1.bf16.msra.mxu0 %v341
  %373 = vmatprep.subr.bf16.mxu0 0
  %374 = vmatpush2.bf16.msra.mxu0 0
  %375 = vmatprep.subr.bf16.mxu0 0
  %376 = vmatpush2.bf16.msra.mxu0 0
  %377 = vmatprep.subr.bf16.mxu0 0
  %378 = vmatpush2.bf16.msra.mxu0 0
  %379 = vmatprep.subr.bf16.mxu0 0
  %380 = vmatpush2.bf16.msra.mxu0 0
  %381 = vmatprep.subr.bf16.mxu0 0
  %382 = vmatpush2.bf16.msra.mxu0 0
  %383 = vmatprep.subr.bf16.mxu0 0
  %384 = vmatpush2.bf16.msra.mxu0 0
  %385 = vmatprep.subr.bf16.mxu0 0
  %386 = vmatpush2.bf16.msra.mxu0 0
  %387 = vmatprep.subr.bf16.mxu0 0
  %388 = vmatpush2.bf16.msra.mxu0 0
  %389 = vmatprep.mubr.bf16.mxu0 0
  %390 = vmatmul.mubr.bf16.gmra.mxu0 %v44
  %v391 = vpop.f32.mrf.mxu0
  %v392 = vadd.f32 %v307, %v391
  %v393 = vpop.f32.mrf.mxu0
  %v394 = vpop.f32.mrf.mxu0
  %v395 = vadd.f32 %v308, %v394
  %v396 = vpop.f32.mrf.mxu0
  %397 = vdwg.mxu0
  %vm398 = vcmp.eq.s32.totalorder %v298, 15
  %vm399 = vcmp.eq.s32.totalorder %v299, 15
  %v400 = vrot.slane %v267, 1
  %v401 = vrot.slane %v270, 1
  %vm402 = vcmp.lt.s32.totalorder %v274, 7
  %v403 = vsel %vm402, %v400, %v401
  %v404 = vsel %vm402, %v401, %v400
  %v405 = vsel %vm398, 0.0, %v403
  %v406 = vsel %vm399, 0.0, %v404
  %v407 = vadd.f32 %v392, %v405
  %v408 = vadd.f32 %v395, %v406
  %v409 = vadd.f32 %v407, %v408
  %v410 = vrot.slane %v409, 4
  %v411 = vadd.f32 %v409, %v410
  %v412 = vrot.slane %v411, 2
  %v413 = vadd.f32 %v411, %v412
  %v414 = vrot.slane %v413, 1
  %v415 = vadd.f32 %v413, %v414
  %v416 = vmul.f32 %v407, %v407
  %v417 = vmul.f32 %v408, %v408
  %v418 = vadd.f32 %v416, %v417
  %v419 = vrot.slane %v418, 4
  %v420 = vadd.f32 %v418, %v419
  %v421 = vrot.slane %v420, 2
  %v422 = vadd.f32 %v420, %v421
  %v423 = vrot.slane %v422, 1
  %v424 = vadd.f32 %v422, %v423
  %vm425 = vcmask 1040384
  %v426 = vsel %vm425, %v415, %v424
  %427 = vst [vmem:[%s5] sm:$0x3] %v426
  %v428 = vpack.c.bf16 %v408, %v407
  %v430 = vunpack.c.l.b16 %v428
  %v431 = vunpack.c.h.b16 %v428
  %v432 = vpack.c.b16 %v430, %v430
  %v433 = vpack.c.b16 %v431, %v431
  %436 = vst [vmem:[%s4] sm:$0xf] %v432
  %437 = vst [vmem:[%s4 + $0x4] sm:$0xf] %v433
  // Predicated region
  $region18: #{residual_block.4} parent=0 // pred_check
    _
  $region19: #{residual_block.4} parent=0 // pred_check_branch
    %439 = sbr.rel (0) target = $region21
  $region20: #{residual_block.4} parent=0 // pred_region
    _
  $region21: #{residual_block.4} parent=0 // pred_fallthru
    _
  // Predicated region
  $region22: #{residual_block.4} parent=0 // pred_check
    _
  $region23: #{residual_block.4} parent=0 // pred_check_branch
    %441 = sbr.rel (0) target = $region25
  $region24: #{residual_block.4} parent=0 // pred_region
    _
  $region25: #{residual_block.4} parent=0 // pred_fallthru
    _
  // Predicated region
  $region26: #{residual_block.4} parent=0 // pred_check
    _
  $region27: #{residual_block.4} parent=0 // pred_check_branch
    %443 = sbr.rel (0) target = $region29
  $region28: #{residual_block.4} parent=0 // pred_region
    _
  $region29: #{residual_block.4} parent=0 // pred_fallthru
    _
  // Predicated region
  $region30: #{residual_block.4} parent=0 // pred_check
    _
  $region31: #{residual_block.4} parent=0 // pred_check_branch
    %445 = sbr.rel (0) target = $region33
  $region32: #{residual_block.4} parent=0 // pred_region
    _
  $region33: #{residual_block.4} parent=0 // pred_fallthru
    _

</llo_original>
